<compile_context>
chip_gen: v6e
topology: v6e:2x2x1
jax: 0.10.0
libtpu: 0.0.40
codegen_flags: <defaults>
</compile_context>

<pallas_src>
import functools
import math

import jax
import jax.numpy as jnp
from jax.experimental import pallas as pl
from jax.experimental.pallas import tpu as pltpu


# ----------------------------------------------------------------------------
# Fused multi-layer kernel: (x @ W0 + b0, ReLU) -> ... -> (x @ Wn-1 + bn-1)
# Weights arrive pre-masked (Bayes dropout) and pre-folded with BatchNorm.
# ----------------------------------------------------------------------------
def _bayes_chain_kernel(*refs, n_layers: int, relu_flags: tuple):
    x_ref = refs[0]
    o_ref = refs[-1]
    h = x_ref[...]                                   # (TM, Cin) bf16
    for i in range(n_layers):
        w_ref = refs[1 + 2 * i]                      # (Cin_i, Cout_i) bf16
        b_ref = refs[2 + 2 * i]                      # (1, Cout_i)     f32
        y = jnp.dot(h, w_ref[...], preferred_element_type=jnp.float32)
        y = y + b_ref[...]                           # folded conv-bias + BN shift
        if relu_flags[i]:
            y = jnp.maximum(y, 0.0)
        # bf16 between layers, f32 accumulation inside each matmul.
        h = y.astype(jnp.bfloat16) if i < n_layers - 1 else y
    o_ref[...] = h.astype(o_ref.dtype)


def bayes_chain_fused(x2d_bf16, folded_layers, *, tm=256):
    """x2d_bf16: (M, Cin) bf16 with M % tm == 0.
    folded_layers: list of (w_bf16 (Cin_i, Cout_i), b_f32 (1, Cout_i))."""
    M, Cin = x2d_bf16.shape
    n_layers = len(folded_layers)
    Cout = folded_layers[-1][0].shape[1]
    relu_flags = tuple(i < n_layers - 1 for i in range(n_layers))

    in_specs = [pl.BlockSpec((tm, Cin), lambda i: (i, 0))]
    args = [x2d_bf16]
    for w, b in folded_layers:
        # Weights / biases: full-array blocks, constant index_map -> stay
        # resident in VMEM across all M-tile grid steps.
        in_specs.append(pl.BlockSpec(w.shape, lambda i: (0, 0)))
        in_specs.append(pl.BlockSpec(b.shape, lambda i: (0, 0)))
        args += [w, b]

    kernel = functools.partial(
        _bayes_chain_kernel, n_layers=n_layers, relu_flags=relu_flags)

    # NOTE: for the default production dims (1920/1024/512/1024) raise
    # vmem_limit_bytes and/or add a K-tile grid axis (accumulator scratch with
    # pl.when init/finalize); the demo footprint fits every generation's
    # default scoped-VMEM limit, so we leave the default.
    return pl.pallas_call(
        kernel,
        out_shape=jax.ShapeDtypeStruct((M, Cout), jnp.float32),
        grid=(M // tm,),
        in_specs=in_specs,
        out_specs=pl.BlockSpec((tm, Cout), lambda i: (i, 0)),
        compiler_params=pltpu.CompilerParams(
            dimension_semantics=("parallel",)),   # megacore sharding on v7x
    )(*args)


# ----------------------------------------------------------------------------
# Parameter construction (deterministic, mirrors the PyTorch __init__ shapes)
# ----------------------------------------------------------------------------
def init_bayes_head_params(key, in_dim, mid_dim, out_dim):
    dim_list = [in_dim] + list(mid_dim) + [out_dim]
    params = []
    for i in range(len(dim_list) - 1):
        cin, cout = dim_list[i], dim_list[i + 1]
        key, kw, kb, kg, kbeta, km, kv = jax.random.split(key, 7)
        # kaiming_uniform_(a=sqrt(5)) on (cout, cin, 1, 1): bound = 1/sqrt(fan_in)
        bound = 1.0 / math.sqrt(cin)
        w = jax.random.uniform(kw, (cout, cin), jnp.float32, -bound, bound)
        b = jax.random.uniform(kb, (cout,), jnp.float32, -bound, bound)
        # BatchNorm affine + running stats (deterministic, non-trivial values)
        gamma = 1.0 + 0.1 * jax.random.normal(kg, (cout,), jnp.float32)
        beta = 0.1 * jax.random.normal(kbeta, (cout,), jnp.float32)
        rmean = 0.05 * jax.random.normal(km, (cout,), jnp.float32)
        rvar = 1.0 + 0.1 * jax.random.uniform(kv, (cout,), jnp.float32)
        params.append(dict(w=w, b=b, gamma=gamma, beta=beta,
                           rmean=rmean, rvar=rvar))
    return params


# ----------------------------------------------------------------------------
# Bayes_head forward
# ----------------------------------------------------------------------------
def bayes_head_forward(x_nchw, params, mask_key, p=0.7, eps=1e-5, tm=256):
    N, C, H, W = x_nchw.shape
    # NCHW -> (M, C): channels on the 128-lane axis, pixels on sublanes.
    x2d = jnp.transpose(x_nchw, (0, 2, 3, 1)).reshape(N * H * W, C)
    M = x2d.shape[0]
    M_pad = ((M + tm - 1) // tm) * tm
    if M_pad != M:
        x2d = jnp.pad(x2d, ((0, M_pad - M), (0, 0)))
    x2d = x2d.astype(jnp.bfloat16)

    n_layers = len(params)
    keys = jax.random.split(mask_key, 2 * n_layers)
    folded = []
    for i, layer in enumerate(params):
        w, b = layer["w"], layer["b"]                       # (cout, cin), (cout,)
        # Bayes dropout: elementwise Bernoulli(p) keep-mask, NO 1/p rescaling
        # (matches Bayes_Dropout_Conv2d.sample_weight exactly).
        wmask = jax.random.bernoulli(keys[2 * i], p, w.shape)
        bmask = jax.random.bernoulli(keys[2 * i + 1], p, b.shape)
        # Fold eval-mode BatchNorm into the masked weights/bias (single fused
        # XLA expression; no intermediate masked-weight array kept around).
        scale = layer["gamma"] / jnp.sqrt(layer["rvar"] + eps)   # (cout,)
        shift = layer["beta"] - layer["rmean"] * scale           # (cout,)
        w_fold = (jnp.where(wmask, w, 0.0).T * scale[None, :]).astype(jnp.bfloat16)
        b_fold = (jnp.where(bmask, b, 0.0) * scale + shift)[None, :]  # (1, cout) f32
        folded.append((w_fold, b_fold))

    out2d = bayes_chain_fused(x2d, folded, tm=tm)          # (M_pad, cout) f32
    out2d = out2d[:M]
    cout = out2d.shape[1]
    return jnp.transpose(out2d.reshape(N, H, W, cout), (0, 3, 1, 2))


# ----------------------------------------------------------------------------
if __name__ == "__main__":
    # Small, TPU-friendly shapes consistent with Bayes_head's structure
    # (default is in_dim=1920, mid_dim=[1024,512], out_dim=1024 — scaled down).
    in_dim, mid_dim, out_dim = 128, [256, 128], 256
    N, H, W = 2, 16, 16          # M = N*H*W = 512 -> 2 tiles of 256 rows
    p = 0.7

    root = jax.random.PRNGKey(0)
    k_x, k_params, k_mask = jax.random.split(root, 3)

    x = jax.random.normal(k_x, (N, in_dim, H, W), jnp.float32)   # NCHW input
    params = init_bayes_head_params(k_params, in_dim, mid_dim, out_dim)

    out = bayes_head_forward(x, params, k_mask, p=p)
    out = jax.block_until_ready(out)

    assert out.shape == (N, out_dim, H, W), out.shape
    assert bool(jnp.all(jnp.isfinite(out)))
    print("KERNEL_OK")
</pallas_src>

<mosaic_0001>
module attributes {stable_mosaic.version = 11 : i64} {
  func.func @_bayes_chain_kernel(%arg0: i32, %arg1: memref<256x128xbf16, #tpu.memory_space<vmem>>, %arg2: memref<128x256xbf16, #tpu.memory_space<vmem>>, %arg3: memref<1x256xf32, #tpu.memory_space<vmem>>, %arg4: memref<256x128xbf16, #tpu.memory_space<vmem>>, %arg5: memref<1x128xf32, #tpu.memory_space<vmem>>, %arg6: memref<128x256xbf16, #tpu.memory_space<vmem>>, %arg7: memref<1x256xf32, #tpu.memory_space<vmem>>, %arg8: memref<256x256xf32, #tpu.memory_space<vmem>>) attributes {dimension_semantics = [#tpu.dimension_semantics<parallel>], iteration_bounds = array<i64: 2>, scalar_prefetch = 0 : i64, scratch_operands = 0 : i64, tpu.core_type = #tpu.core_type<tc>, window_params = [{transform_indices = @transform_0, window_bounds = array<i64: 256, 128>}, {pipeline_mode = #tpu.pipeline_mode<synchronous>, transform_indices = @transform_1, window_bounds = array<i64: 128, 256>}, {pipeline_mode = #tpu.pipeline_mode<synchronous>, transform_indices = @transform_2, window_bounds = array<i64: 1, 256>}, {pipeline_mode = #tpu.pipeline_mode<synchronous>, transform_indices = @transform_3, window_bounds = array<i64: 256, 128>}, {pipeline_mode = #tpu.pipeline_mode<synchronous>, transform_indices = @transform_4, window_bounds = array<i64: 1, 128>}, {pipeline_mode = #tpu.pipeline_mode<synchronous>, transform_indices = @transform_5, window_bounds = array<i64: 128, 256>}, {pipeline_mode = #tpu.pipeline_mode<synchronous>, transform_indices = @transform_6, window_bounds = array<i64: 1, 256>}, {transform_indices = @transform_7, window_bounds = array<i64: 256, 256>}]} {
    %c0 = arith.constant 0 : index
    %c0_0 = arith.constant 0 : index
    %0 = vector.load %arg1[%c0, %c0_0] : memref<256x128xbf16, #tpu.memory_space<vmem>>, vector<256x128xbf16>
    %c0_1 = arith.constant 0 : index
    %c0_2 = arith.constant 0 : index
    %1 = vector.load %arg2[%c0_1, %c0_2] : memref<128x256xbf16, #tpu.memory_space<vmem>>, vector<128x256xbf16>
    %cst = arith.constant dense<0.000000e+00> : vector<256x256xf32>
    %2 = tpu.matmul %0, %1, %cst {dimension_numbers = #tpu.dot_dimension_numbers<[1], [0], [0], [1], [0, 0, 1, 1], [], []>} : vector<256x128xbf16>, vector<128x256xbf16>, vector<256x256xf32> -> vector<256x256xf32>
    %c0_3 = arith.constant 0 : index
    %c0_4 = arith.constant 0 : index
    %3 = vector.load %arg3[%c0_3, %c0_4] : memref<1x256xf32, #tpu.memory_space<vmem>>, vector<1x256xf32>
    %4 = vector.broadcast %3 : vector<1x256xf32> to vector<256x256xf32>
    %5 = arith.addf %2, %4 : vector<256x256xf32>
    %cst_5 = arith.constant 0.000000e+00 : f32
    %6 = vector.broadcast %cst_5 : f32 to vector<256x256xf32>
    %7 = arith.maximumf %5, %6 : vector<256x256xf32>
    %8 = arith.truncf %7 : vector<256x256xf32> to vector<256x256xbf16>
    %c0_6 = arith.constant 0 : index
    %c0_7 = arith.constant 0 : index
    %9 = vector.load %arg4[%c0_6, %c0_7] : memref<256x128xbf16, #tpu.memory_space<vmem>>, vector<256x128xbf16>
    %cst_8 = arith.constant dense<0.000000e+00> : vector<256x128xf32>
    %10 = tpu.matmul %8, %9, %cst_8 {dimension_numbers = #tpu.dot_dimension_numbers<[1], [0], [0], [1], [0, 0, 1, 1], [], []>} : vector<256x256xbf16>, vector<256x128xbf16>, vector<256x128xf32> -> vector<256x128xf32>
    %c0_9 = arith.constant 0 : index
    %c0_10 = arith.constant 0 : index
    %11 = vector.load %arg5[%c0_9, %c0_10] : memref<1x128xf32, #tpu.memory_space<vmem>>, vector<1x128xf32>
    %12 = vector.broadcast %11 : vector<1x128xf32> to vector<256x128xf32>
    %13 = arith.addf %10, %12 : vector<256x128xf32>
    %cst_11 = arith.constant 0.000000e+00 : f32
    %14 = vector.broadcast %cst_11 : f32 to vector<256x128xf32>
    %15 = arith.maximumf %13, %14 : vector<256x128xf32>
    %16 = arith.truncf %15 : vector<256x128xf32> to vector<256x128xbf16>
    %c0_12 = arith.constant 0 : index
    %c0_13 = arith.constant 0 : index
    %17 = vector.load %arg6[%c0_12, %c0_13] : memref<128x256xbf16, #tpu.memory_space<vmem>>, vector<128x256xbf16>
    %cst_14 = arith.constant dense<0.000000e+00> : vector<256x256xf32>
    %18 = tpu.matmul %16, %17, %cst_14 {dimension_numbers = #tpu.dot_dimension_numbers<[1], [0], [0], [1], [0, 0, 1, 1], [], []>} : vector<256x128xbf16>, vector<128x256xbf16>, vector<256x256xf32> -> vector<256x256xf32>
    %c0_15 = arith.constant 0 : index
    %c0_16 = arith.constant 0 : index
    %19 = vector.load %arg7[%c0_15, %c0_16] : memref<1x256xf32, #tpu.memory_space<vmem>>, vector<1x256xf32>
    %20 = vector.broadcast %19 : vector<1x256xf32> to vector<256x256xf32>
    %21 = arith.addf %18, %20 : vector<256x256xf32>
    %c0_17 = arith.constant 0 : index
    %c0_18 = arith.constant 0 : index
    %22 = vector.load %arg8[%c0_17, %c0_18] : memref<256x256xf32, #tpu.memory_space<vmem>>, vector<256x256xf32>
    tpu.vector_store %arg8[%c0_17, %c0_18], %21 {strides = array<i32>} : memref<256x256xf32, #tpu.memory_space<vmem>>, vector<256x256xf32>,
    return
  }
  func.func @transform_0(%arg0: i32) -> (i32, i32) {
    %c0_i32 = arith.constant 0 : i32
    %c0_i32_0 = arith.constant 0 : i32
    return %arg0, %c0_i32 : i32, i32
  }
  func.func @transform_1(%arg0: i32) -> (i32, i32) {
    %c0_i32 = arith.constant 0 : i32
    %c0_i32_0 = arith.constant 0 : i32
    %c0_i32_1 = arith.constant 0 : i32
    return %c0_i32, %c0_i32_0 : i32, i32
  }
  func.func @transform_2(%arg0: i32) -> (i32, i32) {
    %c0_i32 = arith.constant 0 : i32
    %c0_i32_0 = arith.constant 0 : i32
    %c0_i32_1 = arith.constant 0 : i32
    return %c0_i32, %c0_i32_0 : i32, i32
  }
  func.func @transform_3(%arg0: i32) -> (i32, i32) {
    %c0_i32 = arith.constant 0 : i32
    %c0_i32_0 = arith.constant 0 : i32
    %c0_i32_1 = arith.constant 0 : i32
    return %c0_i32, %c0_i32_0 : i32, i32
  }
  func.func @transform_4(%arg0: i32) -> (i32, i32) {
    %c0_i32 = arith.constant 0 : i32
    %c0_i32_0 = arith.constant 0 : i32
    %c0_i32_1 = arith.constant 0 : i32
    return %c0_i32, %c0_i32_0 : i32, i32
  }
  func.func @transform_5(%arg0: i32) -> (i32, i32) {
    %c0_i32 = arith.constant 0 : i32
    %c0_i32_0 = arith.constant 0 : i32
    %c0_i32_1 = arith.constant 0 : i32
    return %c0_i32, %c0_i32_0 : i32, i32
  }
  func.func @transform_6(%arg0: i32) -> (i32, i32) {
    %c0_i32 = arith.constant 0 : i32
    %c0_i32_0 = arith.constant 0 : i32
    %c0_i32_1 = arith.constant 0 : i32
    return %c0_i32, %c0_i32_0 : i32, i32
  }
  func.func @transform_7(%arg0: i32) -> (i32, i32) {
    %c0_i32 = arith.constant 0 : i32
    %c0_i32_0 = arith.constant 0 : i32
    return %arg0, %c0_i32 : i32, i32
  }
}

</mosaic_0001>

<llo_original>
// kernel: tpu_custom_call.1
$region0: #{tpu_custom_call.1}
  #allocation0 [shape = 'u32[]', space=smem, size = 0x4, offset = 0x4, fixed_abs, tag = 'smem constant byte address 0x4 - core index']
  #allocation1 [shape = 'u32[144,128]{1,0:T(1,128)}', space=vmem, size = 0x12000, scoped, tag = 'internal scratch']
  %s0 = inlined_call_operand.hbm [shape: bf16[512,128], index: 0, kind: input, shape index: {}]
  %s1 = inlined_call_operand.hbm [shape: bf16[128,256], index: 1, kind: input, shape index: {}]
  %s2 = inlined_call_operand.vmem [shape: f32[1,256], index: 2, kind: input, shape index: {}]
  %s3 = inlined_call_operand.hbm [shape: bf16[256,128], index: 3, kind: input, shape index: {}]
  %s4 = inlined_call_operand.vmem [shape: f32[1,128], index: 4, kind: input, shape index: {}]
  %s5 = inlined_call_operand.hbm [shape: bf16[128,256], index: 5, kind: input, shape index: {}]
  %s6 = inlined_call_operand.vmem [shape: f32[1,256], index: 6, kind: input, shape index: {}]
  %s7 = inlined_call_operand.hbm [shape: f32[512,256], index: 7, kind: output, shape index: {}]
  %s8 = sld [smem:[#allocation0]]
  $region77: #{tpu_custom_call.1} parent=0
    _
  %s10 = ssub.s32 1, %s8
  %s11 = scalar_select 0, %s10, %s8
  $region1: #{tpu_custom_call.1} parent=0
    #allocation2 [shape = 'u8[131072]{0}', space=vmem, size = 0x20000, scoped, tag = 'input window, operand 0']
    #allocation3 [shape = 's32[2]{0}', space=sflag, size = 0x8, scoped, tag = 'scoped memory for tpu_custom_call.1']
    #allocation4 [shape = 's32[2]{0}', space=sflag, size = 0x8, scoped, tag = 'scoped memory for tpu_custom_call.1']
    #allocation5 [shape = 'u8[65536]{0}', space=vmem, size = 0x10000, scoped, tag = 'input window, operand 1, single buffered']
    #allocation6 [shape = 's32[1]{0}', space=sflag, size = 0x4, scoped, tag = 'scoped memory for tpu_custom_call.1']
    #allocation7 [shape = 'u8[65536]{0}', space=vmem, size = 0x10000, scoped, tag = 'input window, operand 3, single buffered']
    #allocation8 [shape = 'u8[65536]{0}', space=vmem, size = 0x10000, scoped, tag = 'input window, operand 5, single buffered']
    #allocation9 [shape = 's32[1]{0}', space=sflag, size = 0x4, scoped, tag = 'scoped memory for tpu_custom_call.1']
    #allocation10 [shape = 'u8[524288]{0}', space=vmem, size = 0x80000, scoped, tag = 'output window, operand 0']
    %12 = vsyncpa [#allocation3], 0
    %s13 = scalar_lea.sflag [#allocation3], 1
    %14 = vsyncpa %s13, 0
    %15 = vsyncpa [#allocation6], 0
    %16 = vsyncpa [#allocation9], 0
    %17 = vsyncpa [#allocation4], 0
    %s18 = scalar_lea.sflag [#allocation4], 1
    %19 = vsyncpa %s18, 0
    loop: start=0, step=1, limit=4
    $region2: #{tpu_custom_call.1} parent=1 // loop_pre_header
      _
    $region3: #{tpu_custom_call.1} parent=1 // loop_header
      %s21 = sphi 0, %s25
      %p22 = scmp.ge.s32.totalorder %s21, 4
      %s31 = sphi 0, %s33
      %s34 = sphi 0, %s31
      %s35 = sphi 0, %s34
      %s51 = sphi 0, %s35
      %s55 = sphi 0, %s55
      %s57 = sphi 0, %s55
      %s58 = sphi 0, %s57
      %s72 = sphi 0, %s58
      %s76 = sphi 0, %s76
      %s78 = sphi 0, %s76
      %s79 = sphi 0, %s78
      %s93 = sphi 0, %s79
      %s97 = sphi 0, %s97
      %s99 = sphi 0, %s97
      %s100 = sphi 0, %s99
      %s114 = sphi 0, %s100
      %s118 = sphi 0, %s118
      %s120 = sphi 0, %s118
      %s121 = sphi 0, %s120
      %s135 = sphi 0, %s121
      %s139 = sphi 0, %s139
      %s141 = sphi 0, %s139
      %s142 = sphi 0, %s141
      %s156 = sphi 0, %s142
      %s160 = sphi 0, %s160
      %s162 = sphi 0, %s160
      %s163 = sphi 0, %s162
      %s177 = sphi 0, %s163
      %s183 = sphi 0, %s185
      %s186 = sphi 0, %s183
      %s187 = sphi 0, %s186
      %s203 = sphi 0, %s187
    $region4: #{tpu_custom_call.1} parent=1 // loop_header_branch
      %24 = sbr.rel (%p22) target = $region8
    $region5: #{tpu_custom_call.1} parent=1 // loop_body
      %s26 = ssub.s32 %s21, 1
      %s27 = ssub.s32 %s21, 2
      %s28 = sadd.s32 %s21, 1
      %s29 = ssub.s32 %s21, %s28
      %p30 = scmp.eq.s32.totalorder %s29, 0
      %s32 = sadd.s32 %s31, 1
      %s33 = scalar_select %p30, %s31, %s32
      %p36 = pneg %p30
      %p37 = scmp.eq.s32.totalorder %s21, 1
      %p38 = por %p36, %p37
      %p39 = scmp.ne.s32.totalorder %s31, %s34
      %p40 = scmp.eq.s32.totalorder %s21, 0
      %p41 = por %p39, %p40
      %p42 = scmp.ne.s32.totalorder %s31, %s34
      %p43 = scmp.eq.s32.totalorder %s26, 1
      %p44 = por %p42, %p43
      %p45 = scmp.ne.s32.totalorder %s34, %s35
      %p46 = scmp.eq.s32.totalorder %s26, 0
      %p47 = por %p45, %p46
      %p48 = scmp.ne.s32.totalorder %s34, %s35
      %p49 = scmp.eq.s32.totalorder %s27, 1
      %p50 = por %p48, %p49
      %p52 = scmp.ne.s32.totalorder %s35, %s51
      %p53 = scmp.eq.s32.totalorder %s27, 0
      %p54 = por %p52, %p53
      %s56 = sadd.s32 %s55, 1
      %p59 = scmp.eq.s32.totalorder %s21, 1
      %p60 = scmp.ne.s32.totalorder %s55, %s57
      %p61 = scmp.eq.s32.totalorder %s21, 0
      %p62 = por %p60, %p61
      %p63 = scmp.ne.s32.totalorder %s55, %s57
      %p64 = scmp.eq.s32.totalorder %s26, 1
      %p65 = por %p63, %p64
      %p66 = scmp.ne.s32.totalorder %s57, %s58
      %p67 = scmp.eq.s32.totalorder %s26, 0
      %p68 = por %p66, %p67
      %p69 = scmp.ne.s32.totalorder %s57, %s58
      %p70 = scmp.eq.s32.totalorder %s27, 1
      %p71 = por %p69, %p70
      %p73 = scmp.ne.s32.totalorder %s58, %s72
      %p74 = scmp.eq.s32.totalorder %s27, 0
      %p75 = por %p73, %p74
      %s77 = sadd.s32 %s76, 1
      %p80 = scmp.eq.s32.totalorder %s21, 1
      %p81 = scmp.ne.s32.totalorder %s76, %s78
      %p82 = scmp.eq.s32.totalorder %s21, 0
      %p83 = por %p81, %p82
      %p84 = scmp.ne.s32.totalorder %s76, %s78
      %p85 = scmp.eq.s32.totalorder %s26, 1
      %p86 = por %p84, %p85
      %p87 = scmp.ne.s32.totalorder %s78, %s79
      %p88 = scmp.eq.s32.totalorder %s26, 0
      %p89 = por %p87, %p88
      %p90 = scmp.ne.s32.totalorder %s78, %s79
      %p91 = scmp.eq.s32.totalorder %s27, 1
      %p92 = por %p90, %p91
      %p94 = scmp.ne.s32.totalorder %s79, %s93
      %p95 = scmp.eq.s32.totalorder %s27, 0
      %p96 = por %p94, %p95
      %s98 = sadd.s32 %s97, 1
      %p101 = scmp.eq.s32.totalorder %s21, 1
      %p102 = scmp.ne.s32.totalorder %s97, %s99
      %p103 = scmp.eq.s32.totalorder %s21, 0
      %p104 = por %p102, %p103
      %p105 = scmp.ne.s32.totalorder %s97, %s99
      %p106 = scmp.eq.s32.totalorder %s26, 1
      %p107 = por %p105, %p106
      %p108 = scmp.ne.s32.totalorder %s99, %s100
      %p109 = scmp.eq.s32.totalorder %s26, 0
      %p110 = por %p108, %p109
      %p111 = scmp.ne.s32.totalorder %s99, %s100
      %p112 = scmp.eq.s32.totalorder %s27, 1
      %p113 = por %p111, %p112
      %p115 = scmp.ne.s32.totalorder %s100, %s114
      %p116 = scmp.eq.s32.totalorder %s27, 0
      %p117 = por %p115, %p116
      %s119 = sadd.s32 %s118, 1
      %p122 = scmp.eq.s32.totalorder %s21, 1
      %p123 = scmp.ne.s32.totalorder %s118, %s120
      %p124 = scmp.eq.s32.totalorder %s21, 0
      %p125 = por %p123, %p124
      %p126 = scmp.ne.s32.totalorder %s118, %s120
      %p127 = scmp.eq.s32.totalorder %s26, 1
      %p128 = por %p126, %p127
      %p129 = scmp.ne.s32.totalorder %s120, %s121
      %p130 = scmp.eq.s32.totalorder %s26, 0
      %p131 = por %p129, %p130
      %p132 = scmp.ne.s32.totalorder %s120, %s121
      %p133 = scmp.eq.s32.totalorder %s27, 1
      %p134 = por %p132, %p133
      %p136 = scmp.ne.s32.totalorder %s121, %s135
      %p137 = scmp.eq.s32.totalorder %s27, 0
      %p138 = por %p136, %p137
      %s140 = sadd.s32 %s139, 1
      %p143 = scmp.eq.s32.totalorder %s21, 1
      %p144 = scmp.ne.s32.totalorder %s139, %s141
      %p145 = scmp.eq.s32.totalorder %s21, 0
      %p146 = por %p144, %p145
      %p147 = scmp.ne.s32.totalorder %s139, %s141
      %p148 = scmp.eq.s32.totalorder %s26, 1
      %p149 = por %p147, %p148
      %p150 = scmp.ne.s32.totalorder %s141, %s142
      %p151 = scmp.eq.s32.totalorder %s26, 0
      %p152 = por %p150, %p151
      %p153 = scmp.ne.s32.totalorder %s141, %s142
      %p154 = scmp.eq.s32.totalorder %s27, 1
      %p155 = por %p153, %p154
      %p157 = scmp.ne.s32.totalorder %s142, %s156
      %p158 = scmp.eq.s32.totalorder %s27, 0
      %p159 = por %p157, %p158
      %s161 = sadd.s32 %s160, 1
      %p164 = scmp.eq.s32.totalorder %s21, 1
      %p165 = scmp.ne.s32.totalorder %s160, %s162
      %p166 = scmp.eq.s32.totalorder %s21, 0
      %p167 = por %p165, %p166
      %p168 = scmp.ne.s32.totalorder %s160, %s162
      %p169 = scmp.eq.s32.totalorder %s26, 1
      %p170 = por %p168, %p169
      %p171 = scmp.ne.s32.totalorder %s162, %s163
      %p172 = scmp.eq.s32.totalorder %s26, 0
      %p173 = por %p171, %p172
      %p174 = scmp.ne.s32.totalorder %s162, %s163
      %p175 = scmp.eq.s32.totalorder %s27, 1
      %p176 = por %p174, %p175
      %p178 = scmp.ne.s32.totalorder %s163, %s177
      %p179 = scmp.eq.s32.totalorder %s27, 0
      %p180 = por %p178, %p179
      %s181 = ssub.s32 %s21, %s28
      %p182 = scmp.eq.s32.totalorder %s181, 0
      %s184 = sadd.s32 %s183, 1
      %s185 = scalar_select %p182, %s183, %s184
      %p188 = pneg %p182
      %p189 = scmp.eq.s32.totalorder %s21, 1
      %p190 = por %p188, %p189
      %p191 = scmp.ne.s32.totalorder %s183, %s186
      %p192 = scmp.eq.s32.totalorder %s21, 0
      %p193 = por %p191, %p192
      %p194 = scmp.ne.s32.totalorder %s183, %s186
      %p195 = scmp.eq.s32.totalorder %s26, 1
      %p196 = por %p194, %p195
      %p197 = scmp.ne.s32.totalorder %s186, %s187
      %p198 = scmp.eq.s32.totalorder %s26, 0
      %p199 = por %p197, %p198
      %p200 = scmp.ne.s32.totalorder %s186, %s187
      %p201 = scmp.eq.s32.totalorder %s27, 1
      %p202 = por %p200, %p201
      %p204 = scmp.ne.s32.totalorder %s187, %s203
      %p205 = scmp.eq.s32.totalorder %s27, 0
      %p206 = por %p204, %p205
      %p207 = scmp.le.s32.totalorder 1, %s21
      %p208 = scmp.lt.s32.totalorder %s21, 3
      %p209 = pnand %p207, %p208
      %p210 = pneg %p209
      // Predicated region
      $region9: #{tpu_custom_call.1} parent=5 // pred_check
        _
      $region10: #{tpu_custom_call.1} parent=5 // pred_check_branch
        %212 = sbr.rel (%p209) target = $region12
      $region11: #{tpu_custom_call.1} parent=5 // pred_region
        %s213 = ssub.s32 %s21, 1
        // Predicated region
        $region13: #{tpu_custom_call.1} parent=11 // pred_check
          %p214 = pneg %p68
        $region14: #{tpu_custom_call.1} parent=11 // pred_check_branch
          %216 = sbr.rel (%p214) target = $region16
        $region15: #{tpu_custom_call.1} parent=11 // pred_region
          %s218 = ssub.s32 2048, 2048
          %219 = vsyncadd [#allocation6], %s218
          %s220 = sshll.u32 [#allocation5], 4
          %s221 = int_to_ptr.vmem [resolvable:$true] %s220
          %226 = dma.hbm_to_vmem [thread:$0]  %s1, 2048, %s221, [#allocation6], 128, 128, 8
        $region16: #{tpu_custom_call.1} parent=11 // pred_fallthru
          _
        // Predicated region
        $region17: #{tpu_custom_call.1} parent=11 // pred_check
          %p227 = pneg %p89
        $region18: #{tpu_custom_call.1} parent=11 // pred_check_branch
          %229 = sbr.rel (%p227) target = $region20
        $region19: #{tpu_custom_call.1} parent=11 // pred_region
          _
        $region20: #{tpu_custom_call.1} parent=11 // pred_fallthru
          _
        // Predicated region
        $region21: #{tpu_custom_call.1} parent=11 // pred_check
          %p230 = pneg %p110
        $region22: #{tpu_custom_call.1} parent=11 // pred_check_branch
          %232 = sbr.rel (%p230) target = $region24
        $region23: #{tpu_custom_call.1} parent=11 // pred_region
          %s234 = ssub.s32 2048, 2048
          %235 = vsyncadd [#allocation6], %s234
          %s236 = sshll.u32 [#allocation7], 4
          %s237 = int_to_ptr.vmem [resolvable:$true] %s236
          %242 = dma.hbm_to_vmem [thread:$0]  %s3, 2048, %s237, [#allocation6], 64, 64, 4
        $region24: #{tpu_custom_call.1} parent=11 // pred_fallthru
          _
        // Predicated region
        $region25: #{tpu_custom_call.1} parent=11 // pred_check
          %p243 = pneg %p131
        $region26: #{tpu_custom_call.1} parent=11 // pred_check_branch
          %245 = sbr.rel (%p243) target = $region28
        $region27: #{tpu_custom_call.1} parent=11 // pred_region
          _
        $region28: #{tpu_custom_call.1} parent=11 // pred_fallthru
          _
        // Predicated region
        $region29: #{tpu_custom_call.1} parent=11 // pred_check
          %p246 = pneg %p152
        $region30: #{tpu_custom_call.1} parent=11 // pred_check_branch
          %248 = sbr.rel (%p246) target = $region32
        $region31: #{tpu_custom_call.1} parent=11 // pred_region
          %s250 = ssub.s32 2048, 2048
          %251 = vsyncadd [#allocation9], %s250
          %s252 = sshll.u32 [#allocation8], 4
          %s253 = int_to_ptr.vmem [resolvable:$true] %s252
          %258 = dma.hbm_to_vmem [thread:$0]  %s5, 2048, %s253, [#allocation9], 128, 128, 8
        $region32: #{tpu_custom_call.1} parent=11 // pred_fallthru
          _
        // Predicated region
        $region33: #{tpu_custom_call.1} parent=11 // pred_check
          %p259 = pneg %p173
        $region34: #{tpu_custom_call.1} parent=11 // pred_check_branch
          %261 = sbr.rel (%p259) target = $region36
        $region35: #{tpu_custom_call.1} parent=11 // pred_region
          _
        $region36: #{tpu_custom_call.1} parent=11 // pred_fallthru
          _
      $region12: #{tpu_custom_call.1} parent=5 // pred_fallthru
        _
      %p262 = scmp.lt.s32.totalorder %s21, 2
      // Predicated region
      $region37: #{tpu_custom_call.1} parent=5 // pred_check
        %p263 = pneg %p262
      $region38: #{tpu_custom_call.1} parent=5 // pred_check_branch
        %265 = sbr.rel (%p263) target = $region40
      $region39: #{tpu_custom_call.1} parent=5 // pred_region
        // Predicated region
        $region41: #{tpu_custom_call.1} parent=39 // pred_check
          %p266 = pneg %p41
        $region42: #{tpu_custom_call.1} parent=39 // pred_check_branch
          %268 = sbr.rel (%p266) target = $region44
        $region43: #{tpu_custom_call.1} parent=39 // pred_region
          %s269 = sand.u32 %s31, 1
          %s270 = scalar_lea.sflag [#allocation3], %s269
          %s271 = sand.u32 %s31, 1
          %s272 = smul.addr %s271, 128
          %s273 = scalar_lea.vmem [#allocation2], %s272
          %s274 = smul.u32 32, %s21
          %s276 = ssub.s32 2048, 2048
          %277 = vsyncadd %s270, %s276
          %s278 = smul.addr %s274, 64
          %s279 = scalar_lea.hbm %s0, %s278
          %s280 = sshll.u32 %s273, 4
          %s281 = int_to_ptr.vmem [resolvable:$true] %s280
          %286 = dma.hbm_to_vmem [thread:$0]  %s279, 2048, %s281, %s270, 64, 64, 4
        $region44: #{tpu_custom_call.1} parent=39 // pred_fallthru
          _
      $region40: #{tpu_custom_call.1} parent=5 // pred_fallthru
        _
      %p287 = scmp.le.s32.totalorder 1, %s21
      %p288 = scmp.lt.s32.totalorder %s21, 3
      %p289 = pnand %p287, %p288
      %p290 = pneg %p289
      // Predicated region
      $region45: #{tpu_custom_call.1} parent=5 // pred_check
        _
      $region46: #{tpu_custom_call.1} parent=5 // pred_check_branch
        %292 = sbr.rel (%p289) target = $region48
      $region47: #{tpu_custom_call.1} parent=5 // pred_region
        %s293 = ssub.s32 %s21, 1
        %s294 = sand.u32 %s34, 1
        %s295 = scalar_lea.sflag [#allocation3], %s294
        %s296 = sand.u32 %s34, 1
        %s297 = smul.addr %s296, 128
        %s298 = scalar_lea.vmem [#allocation2], %s297
        // Predicated region
        $region49: #{tpu_custom_call.1} parent=47 // pred_check
          %p299 = pneg %p47
        $region50: #{tpu_custom_call.1} parent=47 // pred_check_branch
          %301 = sbr.rel (%p299) target = $region52
        $region51: #{tpu_custom_call.1} parent=47 // pred_region
          %302 = dma.done %s295, 2048
        $region52: #{tpu_custom_call.1} parent=47 // pred_fallthru
          _
        // Predicated region
        $region53: #{tpu_custom_call.1} parent=47 // pred_check
          %p303 = pneg %p68
        $region54: #{tpu_custom_call.1} parent=47 // pred_check_branch
          %305 = sbr.rel (%p303) target = $region56
        $region55: #{tpu_custom_call.1} parent=47 // pred_region
          %306 = dma.done [#allocation6], 2048
        $region56: #{tpu_custom_call.1} parent=47 // pred_fallthru
          _
        // Predicated region
        $region57: #{tpu_custom_call.1} parent=47 // pred_check
          %p307 = pneg %p110
        $region58: #{tpu_custom_call.1} parent=47 // pred_check_branch
          %309 = sbr.rel (%p307) target = $region60
        $region59: #{tpu_custom_call.1} parent=47 // pred_region
          %310 = dma.done [#allocation6], 2048
        $region60: #{tpu_custom_call.1} parent=47 // pred_fallthru
          _
        // Predicated region
        $region61: #{tpu_custom_call.1} parent=47 // pred_check
          %p311 = pneg %p152
        $region62: #{tpu_custom_call.1} parent=47 // pred_check_branch
          %313 = sbr.rel (%p311) target = $region64
        $region63: #{tpu_custom_call.1} parent=47 // pred_region
          %314 = dma.done [#allocation9], 2048
        $region64: #{tpu_custom_call.1} parent=47 // pred_fallthru
          _
        %s315 = sand.u32 %s34, 1
        %s316 = scalar_lea.sflag [#allocation3], %s315
        %s317 = sand.u32 %s34, 1
        %s318 = smul.addr %s317, 128
        %s319 = scalar_lea.vmem [#allocation2], %s318
        %p320 = pneg %p47
        %p321 = pneg %p44
        %p322 = pneg %p68
        %p323 = pneg %p65
        %p324 = pneg %p89
        %p325 = pneg %p86
        %p326 = pneg %p110
        %p327 = pneg %p107
        %p328 = pneg %p131
        %p329 = pneg %p128
        %p330 = pneg %p152
        %p331 = pneg %p149
        %p332 = pneg %p173
        %p333 = pneg %p170
        %p334 = pneg %p199
        %p335 = pneg %p196
        %s336 = sand.u32 %s186, 1
        %s337 = scalar_lea.sflag [#allocation4], %s336
        %s338 = sand.u32 %s186, 1
        %s339 = smul.addr %s338, 512
        %s340 = scalar_lea.vmem [#allocation10], %s339
        %s341 = smul.u32 32, %s26
        %s342 = smul.u32 32, %s26
        %v344 = vld [vmem:[%s298] sm:$0xf]
        %v345 = vld [vmem:[%s298 + $0x4] sm:$0xf]
        %v346 = vld [vmem:[%s298 + $0x8] sm:$0xf]
        %v347 = vld [vmem:[%s298 + $0xc] sm:$0xf]
        %v348 = vld [vmem:[%s298 + $0x10] sm:$0xf]
        %v349 = vld [vmem:[%s298 + $0x14] sm:$0xf]
        %v350 = vld [vmem:[%s298 + $0x18] sm:$0xf]
        %v351 = vld [vmem:[%s298 + $0x1c] sm:$0xf]
        %v352 = vld [vmem:[%s298 + $0x20] sm:$0xf]
        %v353 = vld [vmem:[%s298 + $0x24] sm:$0xf]
        %v354 = vld [vmem:[%s298 + $0x28] sm:$0xf]
        %v355 = vld [vmem:[%s298 + $0x2c] sm:$0xf]
        %v356 = vld [vmem:[%s298 + $0x30] sm:$0xf]
        %v357 = vld [vmem:[%s298 + $0x34] sm:$0xf]
        %v358 = vld [vmem:[%s298 + $0x38] sm:$0xf]
        %v359 = vld [vmem:[%s298 + $0x3c] sm:$0xf]
        %v360 = vld [vmem:[%s298 + $0x40] sm:$0xf]
        %v361 = vld [vmem:[%s298 + $0x44] sm:$0xf]
        %v362 = vld [vmem:[%s298 + $0x48] sm:$0xf]
        %v363 = vld [vmem:[%s298 + $0x4c] sm:$0xf]
        %v364 = vld [vmem:[%s298 + $0x50] sm:$0xf]
        %v365 = vld [vmem:[%s298 + $0x54] sm:$0xf]
        %v366 = vld [vmem:[%s298 + $0x58] sm:$0xf]
        %v367 = vld [vmem:[%s298 + $0x5c] sm:$0xf]
        %v368 = vld [vmem:[%s298 + $0x60] sm:$0xf]
        %v369 = vld [vmem:[%s298 + $0x64] sm:$0xf]
        %v370 = vld [vmem:[%s298 + $0x68] sm:$0xf]
        %v371 = vld [vmem:[%s298 + $0x6c] sm:$0xf]
        %v372 = vld [vmem:[%s298 + $0x70] sm:$0xf]
        %v373 = vld [vmem:[%s298 + $0x74] sm:$0xf]
        %v374 = vld [vmem:[%s298 + $0x78] sm:$0xf]
        %v375 = vld [vmem:[%s298 + $0x7c] sm:$0xf]
        %v376 = vld [vmem:[#allocation5] sm:$0xff]
        %v377 = vld [vmem:[#allocation5 + $0x8] sm:$0xff]
        %v378 = vld [vmem:[#allocation5 + $0x10] sm:$0xff]
        %v379 = vld [vmem:[#allocation5 + $0x18] sm:$0xff]
        %v380 = vld [vmem:[#allocation5 + $0x20] sm:$0xff]
        %v381 = vld [vmem:[#allocation5 + $0x28] sm:$0xff]
        %v382 = vld [vmem:[#allocation5 + $0x30] sm:$0xff]
        %v383 = vld [vmem:[#allocation5 + $0x38] sm:$0xff]
        %v384 = vld [vmem:[#allocation5 + $0x40] sm:$0xff]
        %v385 = vld [vmem:[#allocation5 + $0x48] sm:$0xff]
        %v386 = vld [vmem:[#allocation5 + $0x50] sm:$0xff]
        %v387 = vld [vmem:[#allocation5 + $0x58] sm:$0xff]
        %v388 = vld [vmem:[#allocation5 + $0x60] sm:$0xff]
        %v389 = vld [vmem:[#allocation5 + $0x68] sm:$0xff]
        %v390 = vld [vmem:[#allocation5 + $0x70] sm:$0xff]
        %v391 = vld [vmem:[#allocation5 + $0x78] sm:$0xff]
        %v392 = vld [vmem:[%s2] sm:$0x3]
        %v394 = vlaneseq
        %v395 = vshrl.u32 %v394, 7
        %v396 = vsub.s32 0, %v395
        %v397 = vrot.slane %v392, %v396
        %v398 = vlaneseq
        %v399 = vshrl.u32 %v398, 7
        %v400 = vsub.s32 1, %v399
        %v401 = vrot.slane %v392, %v400
        %v436 = vunpack.c.l.b16 %v344
        %v437 = vunpack.c.l.b16 %v345
        %v438 = vunpack.c.l.b16 %v346
        %v439 = vunpack.c.l.b16 %v347
        %v440 = vunpack.c.l.b16 %v348
        %v441 = vunpack.c.l.b16 %v349
        %v442 = vunpack.c.l.b16 %v350
        %v443 = vunpack.c.l.b16 %v351
        %v444 = vunpack.c.l.b16 %v352
        %v445 = vunpack.c.l.b16 %v353
        %v446 = vunpack.c.l.b16 %v354
        %v447 = vunpack.c.l.b16 %v355
        %v448 = vunpack.c.l.b16 %v356
        %v449 = vunpack.c.l.b16 %v357
        %v450 = vunpack.c.l.b16 %v358
        %v451 = vunpack.c.l.b16 %v359
        %v452 = vunpack.c.l.b16 %v360
        %v453 = vunpack.c.l.b16 %v361
        %v454 = vunpack.c.l.b16 %v362
        %v455 = vunpack.c.l.b16 %v363
        %v456 = vunpack.c.l.b16 %v364
        %v457 = vunpack.c.l.b16 %v365
        %v458 = vunpack.c.l.b16 %v366
        %v459 = vunpack.c.l.b16 %v367
        %v460 = vunpack.c.l.b16 %v368
        %v461 = vunpack.c.l.b16 %v369
        %v462 = vunpack.c.l.b16 %v370
        %v463 = vunpack.c.l.b16 %v371
        %v464 = vunpack.c.l.b16 %v372
        %v465 = vunpack.c.l.b16 %v373
        %v466 = vunpack.c.l.b16 %v374
        %v467 = vunpack.c.l.b16 %v375
        %v468 = vpack.c.b16 %v437, %v436
        %v469 = vpack.c.b16 %v439, %v438
        %v470 = vpack.c.b16 %v441, %v440
        %v471 = vpack.c.b16 %v443, %v442
        %v472 = vpack.c.b16 %v445, %v444
        %v473 = vpack.c.b16 %v447, %v446
        %v474 = vpack.c.b16 %v449, %v448
        %v475 = vpack.c.b16 %v451, %v450
        %v476 = vpack.c.b16 %v453, %v452
        %v477 = vpack.c.b16 %v455, %v454
        %v478 = vpack.c.b16 %v457, %v456
        %v479 = vpack.c.b16 %v459, %v458
        %v480 = vpack.c.b16 %v461, %v460
        %v481 = vpack.c.b16 %v463, %v462
        %v482 = vpack.c.b16 %v465, %v464
        %v483 = vpack.c.b16 %v467, %v466
        %v516 = vunpack.c.l.b16 %v376
        %v517 = vunpack.c.h.b16 %v376
        %v518 = vunpack.c.l.b16 %v377
        %v519 = vunpack.c.h.b16 %v377
        %v520 = vunpack.c.l.b16 %v378
        %v521 = vunpack.c.h.b16 %v378
        %v522 = vunpack.c.l.b16 %v379
        %v523 = vunpack.c.h.b16 %v379
        %v524 = vunpack.c.l.b16 %v380
        %v525 = vunpack.c.h.b16 %v380
        %v526 = vunpack.c.l.b16 %v381
        %v527 = vunpack.c.h.b16 %v381
        %v528 = vunpack.c.l.b16 %v382
        %v529 = vunpack.c.h.b16 %v382
        %v530 = vunpack.c.l.b16 %v383
        %v531 = vunpack.c.h.b16 %v383
        %v532 = vunpack.c.l.b16 %v384
        %v533 = vunpack.c.h.b16 %v384
        %v534 = vunpack.c.l.b16 %v385
        %v535 = vunpack.c.h.b16 %v385
        %v536 = vunpack.c.l.b16 %v386
        %v537 = vunpack.c.h.b16 %v386
        %v538 = vunpack.c.l.b16 %v387
        %v539 = vunpack.c.h.b16 %v387
        %v540 = vunpack.c.l.b16 %v388
        %v541 = vunpack.c.h.b16 %v388
        %v542 = vunpack.c.l.b16 %v389
        %v543 = vunpack.c.h.b16 %v389
        %v544 = vunpack.c.l.b16 %v390
        %v545 = vunpack.c.h.b16 %v390
        %v546 = vunpack.c.l.b16 %v391
        %v547 = vunpack.c.h.b16 %v391
        %v548 = vpack.c.b16 %v518, %v516
        %v549 = vpack.c.b16 %v519, %v517
        %v550 = vpack.c.b16 %v522, %v520
        %v551 = vpack.c.b16 %v523, %v521
        %v552 = vpack.c.b16 %v526, %v524
        %v553 = vpack.c.b16 %v527, %v525
        %v554 = vpack.c.b16 %v530, %v528
        %v555 = vpack.c.b16 %v531, %v529
        %v556 = vpack.c.b16 %v534, %v532
        %v557 = vpack.c.b16 %v535, %v533
        %v558 = vpack.c.b16 %v538, %v536
        %v559 = vpack.c.b16 %v539, %v537
        %v560 = vpack.c.b16 %v542, %v540
        %v561 = vpack.c.b16 %v543, %v541
        %v562 = vpack.c.b16 %v546, %v544
        %v563 = vpack.c.b16 %v547, %v545
        %580 = vmatprep.subr.bf16.mxu0 %v563
        %581 = vmatpush1.bf16.msra.mxu0 %v562
        %582 = vmatprep.subr.bf16.mxu0 %v561
        %583 = vmatpush1.bf16.msra.mxu0 %v560
        %584 = vmatprep.subr.bf16.mxu0 %v559
        %585 = vmatpush1.bf16.msra.mxu0 %v558
        %586 = vmatprep.subr.bf16.mxu0 %v557
        %587 = vmatpush1.bf16.msra.mxu0 %v556
        %588 = vmatprep.subr.bf16.mxu0 %v555
        %589 = vmatpush1.bf16.msra.mxu0 %v554
        %590 = vmatprep.subr.bf16.mxu0 %v553
        %591 = vmatpush1.bf16.msra.mxu0 %v552
        %592 = vmatprep.subr.bf16.mxu0 %v551
        %593 = vmatpush1.bf16.msra.mxu0 %v550
        %594 = vmatprep.subr.bf16.mxu0 %v549
        %595 = vmatpush1.bf16.msra.mxu0 %v548
        %596 = vmatprep.subr.bf16.mxu0 0
        %597 = vmatpush2.bf16.msra.mxu0 0
        %598 = vmatprep.subr.bf16.mxu0 0
        %599 = vmatpush2.bf16.msra.mxu0 0
        %600 = vmatprep.subr.bf16.mxu0 0
        %601 = vmatpush2.bf16.msra.mxu0 0
        %602 = vmatprep.subr.bf16.mxu0 0
        %603 = vmatpush2.bf16.msra.mxu0 0
        %604 = vmatprep.subr.bf16.mxu0 0
        %605 = vmatpush2.bf16.msra.mxu0 0
        %606 = vmatprep.subr.bf16.mxu0 0
        %607 = vmatpush2.bf16.msra.mxu0 0
        %608 = vmatprep.subr.bf16.mxu0 0
        %609 = vmatpush2.bf16.msra.mxu0 0
        %610 = vmatprep.subr.bf16.mxu0 0
        %611 = vmatpush2.bf16.msra.mxu0 0
        %612 = vmatprep.mubr.bf16.mxu0 0
        %613 = vmatmul.mubr.bf16.gmra.mxu0 %v468
        %v614 = vpop.f32.mrf.mxu0
        %v615 = vadd.f32 %v397, %v614
        %v616 = vpop.f32.mrf.mxu0
        %v617 = vadd.f32 %v401, %v616
        %v618 = vpop.f32.mrf.mxu0
        %v619 = vadd.f32 %v397, %v618
        %v620 = vpop.f32.mrf.mxu0
        %v621 = vadd.f32 %v401, %v620
        %622 = vmatprep.mubr.bf16.mxu0 0
        %623 = vmatmul.mubr.bf16.gmra.mxu0 %v469
        %v624 = vpop.f32.mrf.mxu0
        %v625 = vadd.f32 %v397, %v624
        %v626 = vpop.f32.mrf.mxu0
        %v627 = vadd.f32 %v401, %v626
        %v628 = vpop.f32.mrf.mxu0
        %v629 = vadd.f32 %v397, %v628
        %v630 = vpop.f32.mrf.mxu0
        %v631 = vadd.f32 %v401, %v630
        %632 = vmatprep.mubr.bf16.mxu0 0
        %633 = vmatmul.mubr.bf16.gmra.mxu0 %v470
        %v634 = vpop.f32.mrf.mxu0
        %v635 = vadd.f32 %v397, %v634
        %v636 = vpop.f32.mrf.mxu0
        %v637 = vadd.f32 %v401, %v636
        %v638 = vpop.f32.mrf.mxu0
        %v639 = vadd.f32 %v397, %v638
        %v640 = vpop.f32.mrf.mxu0
        %v641 = vadd.f32 %v401, %v640
        %642 = vmatprep.mubr.bf16.mxu0 0
        %643 = vmatmul.mubr.bf16.gmra.mxu0 %v471
        %v644 = vpop.f32.mrf.mxu0
        %v645 = vadd.f32 %v397, %v644
        %v646 = vpop.f32.mrf.mxu0
        %v647 = vadd.f32 %v401, %v646
        %v648 = vpop.f32.mrf.mxu0
        %v649 = vadd.f32 %v397, %v648
        %v650 = vpop.f32.mrf.mxu0
        %v651 = vadd.f32 %v401, %v650
        %652 = vmatprep.mubr.bf16.mxu0 0
        %653 = vmatmul.mubr.bf16.gmra.mxu0 %v472
        %v654 = vpop.f32.mrf.mxu0
        %v655 = vadd.f32 %v397, %v654
        %v656 = vpop.f32.mrf.mxu0
        %v657 = vadd.f32 %v401, %v656
        %v658 = vpop.f32.mrf.mxu0
        %v659 = vadd.f32 %v397, %v658
        %v660 = vpop.f32.mrf.mxu0
        %v661 = vadd.f32 %v401, %v660
        %662 = vmatprep.mubr.bf16.mxu0 0
        %663 = vmatmul.mubr.bf16.gmra.mxu0 %v473
        %v664 = vpop.f32.mrf.mxu0
        %v665 = vadd.f32 %v397, %v664
        %v666 = vpop.f32.mrf.mxu0
        %v667 = vadd.f32 %v401, %v666
        %v668 = vpop.f32.mrf.mxu0
        %v669 = vadd.f32 %v397, %v668
        %v670 = vpop.f32.mrf.mxu0
        %v671 = vadd.f32 %v401, %v670
        %672 = vmatprep.mubr.bf16.mxu0 0
        %673 = vmatmul.mubr.bf16.gmra.mxu0 %v474
        %v674 = vpop.f32.mrf.mxu0
        %v675 = vadd.f32 %v397, %v674
        %v676 = vpop.f32.mrf.mxu0
        %v677 = vadd.f32 %v401, %v676
        %v678 = vpop.f32.mrf.mxu0
        %v679 = vadd.f32 %v397, %v678
        %v680 = vpop.f32.mrf.mxu0
        %v681 = vadd.f32 %v401, %v680
        %682 = vmatprep.mubr.bf16.mxu0 0
        %683 = vmatmul.mubr.bf16.gmra.mxu0 %v475
        %v684 = vpop.f32.mrf.mxu0
        %v685 = vadd.f32 %v397, %v684
        %v686 = vpop.f32.mrf.mxu0
        %v687 = vadd.f32 %v401, %v686
        %v688 = vpop.f32.mrf.mxu0
        %v689 = vadd.f32 %v397, %v688
        %v690 = vpop.f32.mrf.mxu0
        %v691 = vadd.f32 %v401, %v690
        %692 = vmatprep.mubr.bf16.mxu0 0
        %693 = vmatmul.mubr.bf16.gmra.mxu0 %v476
        %v694 = vpop.f32.mrf.mxu0
        %v695 = vadd.f32 %v397, %v694
        %v696 = vpop.f32.mrf.mxu0
        %v697 = vadd.f32 %v401, %v696
        %v698 = vpop.f32.mrf.mxu0
        %v699 = vadd.f32 %v397, %v698
        %v700 = vpop.f32.mrf.mxu0
        %v701 = vadd.f32 %v401, %v700
        %702 = vmatprep.mubr.bf16.mxu0 0
        %703 = vmatmul.mubr.bf16.gmra.mxu0 %v477
        %v704 = vpop.f32.mrf.mxu0
        %v705 = vadd.f32 %v397, %v704
        %v706 = vpop.f32.mrf.mxu0
        %v707 = vadd.f32 %v401, %v706
        %v708 = vpop.f32.mrf.mxu0
        %v709 = vadd.f32 %v397, %v708
        %v710 = vpop.f32.mrf.mxu0
        %v711 = vadd.f32 %v401, %v710
        %712 = vmatprep.mubr.bf16.mxu0 0
        %713 = vmatmul.mubr.bf16.gmra.mxu0 %v478
        %v714 = vpop.f32.mrf.mxu0
        %v715 = vadd.f32 %v397, %v714
        %v716 = vpop.f32.mrf.mxu0
        %v717 = vadd.f32 %v401, %v716
        %v718 = vpop.f32.mrf.mxu0
        %v719 = vadd.f32 %v397, %v718
        %v720 = vpop.f32.mrf.mxu0
        %v721 = vadd.f32 %v401, %v720
        %722 = vmatprep.mubr.bf16.mxu0 0
        %723 = vmatmul.mubr.bf16.gmra.mxu0 %v479
        %v724 = vpop.f32.mrf.mxu0
        %v725 = vadd.f32 %v397, %v724
        %v726 = vpop.f32.mrf.mxu0
        %v727 = vadd.f32 %v401, %v726
        %v728 = vpop.f32.mrf.mxu0
        %v729 = vadd.f32 %v397, %v728
        %v730 = vpop.f32.mrf.mxu0
        %v731 = vadd.f32 %v401, %v730
        %732 = vmatprep.mubr.bf16.mxu0 0
        %733 = vmatmul.mubr.bf16.gmra.mxu0 %v480
        %v734 = vpop.f32.mrf.mxu0
        %v735 = vadd.f32 %v397, %v734
        %v736 = vpop.f32.mrf.mxu0
        %v737 = vadd.f32 %v401, %v736
        %v738 = vpop.f32.mrf.mxu0
        %v739 = vadd.f32 %v397, %v738
        %v740 = vpop.f32.mrf.mxu0
        %v741 = vadd.f32 %v401, %v740
        %742 = vmatprep.mubr.bf16.mxu0 0
        %743 = vmatmul.mubr.bf16.gmra.mxu0 %v481
        %v744 = vpop.f32.mrf.mxu0
        %v745 = vadd.f32 %v397, %v744
        %v746 = vpop.f32.mrf.mxu0
        %v747 = vadd.f32 %v401, %v746
        %v748 = vpop.f32.mrf.mxu0
        %v749 = vadd.f32 %v397, %v748
        %v750 = vpop.f32.mrf.mxu0
        %v751 = vadd.f32 %v401, %v750
        %752 = vmatprep.mubr.bf16.mxu0 0
        %753 = vmatmul.mubr.bf16.gmra.mxu0 %v482
        %v754 = vpop.f32.mrf.mxu0
        %v755 = vadd.f32 %v397, %v754
        %v756 = vpop.f32.mrf.mxu0
        %v757 = vadd.f32 %v401, %v756
        %v758 = vpop.f32.mrf.mxu0
        %v759 = vadd.f32 %v397, %v758
        %v760 = vpop.f32.mrf.mxu0
        %v761 = vadd.f32 %v401, %v760
        %762 = vmatprep.mubr.bf16.mxu0 0
        %763 = vmatmul.mubr.bf16.gmra.mxu0 %v483
        %v764 = vpop.f32.mrf.mxu0
        %v765 = vadd.f32 %v397, %v764
        %v766 = vpop.f32.mrf.mxu0
        %v767 = vadd.f32 %v401, %v766
        %v768 = vpop.f32.mrf.mxu0
        %v769 = vadd.f32 %v397, %v768
        %v770 = vpop.f32.mrf.mxu0
        %v771 = vadd.f32 %v401, %v770
        %772 = vdwg.mxu0
        %v773 = vmax.f32 %v615, 0.0
        %v774 = vmax.f32 %v617, 0.0
        %v775 = vmax.f32 %v619, 0.0
        %v776 = vmax.f32 %v621, 0.0
        %v777 = vmax.f32 %v625, 0.0
        %v778 = vmax.f32 %v627, 0.0
        %v779 = vmax.f32 %v629, 0.0
        %v780 = vmax.f32 %v631, 0.0
        %v781 = vmax.f32 %v635, 0.0
        %v782 = vmax.f32 %v637, 0.0
        %v783 = vmax.f32 %v639, 0.0
        %v784 = vmax.f32 %v641, 0.0
        %v785 = vmax.f32 %v645, 0.0
        %v786 = vmax.f32 %v647, 0.0
        %v787 = vmax.f32 %v649, 0.0
        %v788 = vmax.f32 %v651, 0.0
        %v789 = vmax.f32 %v655, 0.0
        %v790 = vmax.f32 %v657, 0.0
        %v791 = vmax.f32 %v659, 0.0
        %v792 = vmax.f32 %v661, 0.0
        %v793 = vmax.f32 %v665, 0.0
        %v794 = vmax.f32 %v667, 0.0
        %v795 = vmax.f32 %v669, 0.0
        %v796 = vmax.f32 %v671, 0.0
        %v797 = vmax.f32 %v675, 0.0
        %v798 = vmax.f32 %v677, 0.0
        %v799 = vmax.f32 %v679, 0.0
        %v800 = vmax.f32 %v681, 0.0
        %v801 = vmax.f32 %v685, 0.0
        %v802 = vmax.f32 %v687, 0.0
        %v803 = vmax.f32 %v689, 0.0
        %v804 = vmax.f32 %v691, 0.0
        %v805 = vmax.f32 %v695, 0.0
        %v806 = vmax.f32 %v697, 0.0
        %v807 = vmax.f32 %v699, 0.0
        %v808 = vmax.f32 %v701, 0.0
        %v809 = vmax.f32 %v705, 0.0
        %v810 = vmax.f32 %v707, 0.0
        %v811 = vmax.f32 %v709, 0.0
        %v812 = vmax.f32 %v711, 0.0
        %v813 = vmax.f32 %v715, 0.0
        %v814 = vmax.f32 %v717, 0.0
        %v815 = vmax.f32 %v719, 0.0
        %v816 = vmax.f32 %v721, 0.0
        %v817 = vmax.f32 %v725, 0.0
        %v818 = vmax.f32 %v727, 0.0
        %v819 = vmax.f32 %v729, 0.0
        %v820 = vmax.f32 %v731, 0.0
        %v821 = vmax.f32 %v735, 0.0
        %v822 = vmax.f32 %v737, 0.0
        %v823 = vmax.f32 %v739, 0.0
        %v824 = vmax.f32 %v741, 0.0
        %v825 = vmax.f32 %v745, 0.0
        %v826 = vmax.f32 %v747, 0.0
        %v827 = vmax.f32 %v749, 0.0
        %v828 = vmax.f32 %v751, 0.0
        %v829 = vmax.f32 %v755, 0.0
        %v830 = vmax.f32 %v757, 0.0
        %v831 = vmax.f32 %v759, 0.0
        %v832 = vmax.f32 %v761, 0.0
        %v833 = vmax.f32 %v765, 0.0
        %v834 = vmax.f32 %v767, 0.0
        %v835 = vmax.f32 %v769, 0.0
        %v836 = vmax.f32 %v771, 0.0
        %v837 = vpack.c.bf16 %v775, %v773
        %v838 = vpack.c.bf16 %v776, %v774
        %v839 = vpack.c.bf16 %v779, %v777
        %v840 = vpack.c.bf16 %v780, %v778
        %v841 = vpack.c.bf16 %v783, %v781
        %v842 = vpack.c.bf16 %v784, %v782
        %v843 = vpack.c.bf16 %v787, %v785
        %v844 = vpack.c.bf16 %v788, %v786
        %v845 = vpack.c.bf16 %v791, %v789
        %v846 = vpack.c.bf16 %v792, %v790
        %v847 = vpack.c.bf16 %v795, %v793
        %v848 = vpack.c.bf16 %v796, %v794
        %v849 = vpack.c.bf16 %v799, %v797
        %v850 = vpack.c.bf16 %v800, %v798
        %v851 = vpack.c.bf16 %v803, %v801
        %v852 = vpack.c.bf16 %v804, %v802
        %v853 = vpack.c.bf16 %v807, %v805
        %v854 = vpack.c.bf16 %v808, %v806
        %v855 = vpack.c.bf16 %v811, %v809
        %v856 = vpack.c.bf16 %v812, %v810
        %v857 = vpack.c.bf16 %v815, %v813
        %v858 = vpack.c.bf16 %v816, %v814
        %v859 = vpack.c.bf16 %v819, %v817
        %v860 = vpack.c.bf16 %v820, %v818
        %v861 = vpack.c.bf16 %v823, %v821
        %v862 = vpack.c.bf16 %v824, %v822
        %v863 = vpack.c.bf16 %v827, %v825
        %v864 = vpack.c.bf16 %v828, %v826
        %v865 = vpack.c.bf16 %v831, %v829
        %v866 = vpack.c.bf16 %v832, %v830
        %v867 = vpack.c.bf16 %v835, %v833
        %v868 = vpack.c.bf16 %v836, %v834
        %v869 = vld [vmem:[#allocation7] sm:$0xf]
        %v870 = vld [vmem:[#allocation7 + $0x4] sm:$0xf]
        %v871 = vld [vmem:[#allocation7 + $0x8] sm:$0xf]
        %v872 = vld [vmem:[#allocation7 + $0xc] sm:$0xf]
        %v873 = vld [vmem:[#allocation7 + $0x10] sm:$0xf]
        %v874 = vld [vmem:[#allocation7 + $0x14] sm:$0xf]
        %v875 = vld [vmem:[#allocation7 + $0x18] sm:$0xf]
        %v876 = vld [vmem:[#allocation7 + $0x1c] sm:$0xf]
        %v877 = vld [vmem:[#allocation7 + $0x20] sm:$0xf]
        %v878 = vld [vmem:[#allocation7 + $0x24] sm:$0xf]
        %v879 = vld [vmem:[#allocation7 + $0x28] sm:$0xf]
        %v880 = vld [vmem:[#allocation7 + $0x2c] sm:$0xf]
        %v881 = vld [vmem:[#allocation7 + $0x30] sm:$0xf]
        %v882 = vld [vmem:[#allocation7 + $0x34] sm:$0xf]
        %v883 = vld [vmem:[#allocation7 + $0x38] sm:$0xf]
        %v884 = vld [vmem:[#allocation7 + $0x3c] sm:$0xf]
        %v885 = vld [vmem:[#allocation7 + $0x40] sm:$0xf]
        %v886 = vld [vmem:[#allocation7 + $0x44] sm:$0xf]
        %v887 = vld [vmem:[#allocation7 + $0x48] sm:$0xf]
        %v888 = vld [vmem:[#allocation7 + $0x4c] sm:$0xf]
        %v889 = vld [vmem:[#allocation7 + $0x50] sm:$0xf]
        %v890 = vld [vmem:[#allocation7 + $0x54] sm:$0xf]
        %v891 = vld [vmem:[#allocation7 + $0x58] sm:$0xf]
        %v892 = vld [vmem:[#allocation7 + $0x5c] sm:$0xf]
        %v893 = vld [vmem:[#allocation7 + $0x60] sm:$0xf]
        %v894 = vld [vmem:[#allocation7 + $0x64] sm:$0xf]
        %v895 = vld [vmem:[#allocation7 + $0x68] sm:$0xf]
        %v896 = vld [vmem:[#allocation7 + $0x6c] sm:$0xf]
        %v897 = vld [vmem:[#allocation7 + $0x70] sm:$0xf]
        %v898 = vld [vmem:[#allocation7 + $0x74] sm:$0xf]
        %v899 = vld [vmem:[#allocation7 + $0x78] sm:$0xf]
        %v900 = vld [vmem:[#allocation7 + $0x7c] sm:$0xf]
        %v901 = vld [vmem:[%s4] sm:$0x1]
        %v903 = vlaneseq
        %v904 = vshrl.u32 %v903, 7
        %v905 = vsub.s32 0, %v904
        %v906 = vrot.slane %v901, %v905
        %v940 = vunpack.c.l.b16 %v869
        %v941 = vunpack.c.l.b16 %v870
        %v942 = vunpack.c.l.b16 %v871
        %v943 = vunpack.c.l.b16 %v872
        %v944 = vunpack.c.l.b16 %v873
        %v945 = vunpack.c.l.b16 %v874
        %v946 = vunpack.c.l.b16 %v875
        %v947 = vunpack.c.l.b16 %v876
        %v948 = vunpack.c.l.b16 %v877
        %v949 = vunpack.c.l.b16 %v878
        %v950 = vunpack.c.l.b16 %v879
        %v951 = vunpack.c.l.b16 %v880
        %v952 = vunpack.c.l.b16 %v881
        %v953 = vunpack.c.l.b16 %v882
        %v954 = vunpack.c.l.b16 %v883
        %v955 = vunpack.c.l.b16 %v884
        %v956 = vunpack.c.l.b16 %v885
        %v957 = vunpack.c.l.b16 %v886
        %v958 = vunpack.c.l.b16 %v887
        %v959 = vunpack.c.l.b16 %v888
        %v960 = vunpack.c.l.b16 %v889
        %v961 = vunpack.c.l.b16 %v890
        %v962 = vunpack.c.l.b16 %v891
        %v963 = vunpack.c.l.b16 %v892
        %v964 = vunpack.c.l.b16 %v893
        %v965 = vunpack.c.l.b16 %v894
        %v966 = vunpack.c.l.b16 %v895
        %v967 = vunpack.c.l.b16 %v896
        %v968 = vunpack.c.l.b16 %v897
        %v969 = vunpack.c.l.b16 %v898
        %v970 = vunpack.c.l.b16 %v899
        %v971 = vunpack.c.l.b16 %v900
        %v972 = vpack.c.b16 %v941, %v940
        %v973 = vpack.c.b16 %v943, %v942
        %v974 = vpack.c.b16 %v945, %v944
        %v975 = vpack.c.b16 %v947, %v946
        %v976 = vpack.c.b16 %v949, %v948
        %v977 = vpack.c.b16 %v951, %v950
        %v978 = vpack.c.b16 %v953, %v952
        %v979 = vpack.c.b16 %v955, %v954
        %v980 = vpack.c.b16 %v957, %v956
        %v981 = vpack.c.b16 %v959, %v958
        %v982 = vpack.c.b16 %v961, %v960
        %v983 = vpack.c.b16 %v963, %v962
        %v984 = vpack.c.b16 %v965, %v964
        %v985 = vpack.c.b16 %v967, %v966
        %v986 = vpack.c.b16 %v969, %v968
        %v987 = vpack.c.b16 %v971, %v970
        %1004 = vmatprep.subr.bf16.mxu0 0
        %1005 = vmatpush1.bf16.msra.mxu0 %v979
        %1006 = vmatprep.subr.bf16.mxu0 0
        %1007 = vmatpush1.bf16.msra.mxu0 %v978
        %1008 = vmatprep.subr.bf16.mxu0 0
        %1009 = vmatpush1.bf16.msra.mxu0 %v977
        %1010 = vmatprep.subr.bf16.mxu0 0
        %1011 = vmatpush1.bf16.msra.mxu0 %v976
        %1012 = vmatprep.subr.bf16.mxu0 0
        %1013 = vmatpush1.bf16.msra.mxu0 %v975
        %1014 = vmatprep.subr.bf16.mxu0 0
        %1015 = vmatpush1.bf16.msra.mxu0 %v974
        %1016 = vmatprep.subr.bf16.mxu0 0
        %1017 = vmatpush1.bf16.msra.mxu0 %v973
        %1018 = vmatprep.subr.bf16.mxu0 0
        %1019 = vmatpush1.bf16.msra.mxu0 %v972
        %1020 = vmatprep.subr.bf16.mxu0 0
        %1021 = vmatpush2.bf16.msra.mxu0 %v987
        %1022 = vmatprep.subr.bf16.mxu0 0
        %1023 = vmatpush2.bf16.msra.mxu0 %v986
        %1024 = vmatprep.subr.bf16.mxu0 0
        %1025 = vmatpush2.bf16.msra.mxu0 %v985
        %1026 = vmatprep.subr.bf16.mxu0 0
        %1027 = vmatpush2.bf16.msra.mxu0 %v984
        %1028 = vmatprep.subr.bf16.mxu0 0
        %1029 = vmatpush2.bf16.msra.mxu0 %v983
        %1030 = vmatprep.subr.bf16.mxu0 0
        %1031 = vmatpush2.bf16.msra.mxu0 %v982
        %1032 = vmatprep.subr.bf16.mxu0 0
        %1033 = vmatpush2.bf16.msra.mxu0 %v981
        %1034 = vmatprep.subr.bf16.mxu0 0
        %1035 = vmatpush2.bf16.msra.mxu0 %v980
        %1036 = vmatprep.mubr.bf16.mxu0 %v838
        %1037 = vmatmul.mubr.bf16.gmra.mxu0 %v837
        %v1038 = vpop.f32.mrf.mxu0
        %v1039 = vadd.f32 %v906, %v1038
        %v1040 = vpop.f32.mrf.mxu0
        %v1041 = vpop.f32.mrf.mxu0
        %v1042 = vadd.f32 %v906, %v1041
        %v1043 = vpop.f32.mrf.mxu0
        %1044 = vmatprep.mubr.bf16.mxu0 %v840
        %1045 = vmatmul.mubr.bf16.gmra.mxu0 %v839
        %v1046 = vpop.f32.mrf.mxu0
        %v1047 = vadd.f32 %v906, %v1046
        %v1048 = vpop.f32.mrf.mxu0
        %v1049 = vpop.f32.mrf.mxu0
        %v1050 = vadd.f32 %v906, %v1049
        %v1051 = vpop.f32.mrf.mxu0
        %1052 = vmatprep.mubr.bf16.mxu0 %v842
        %1053 = vmatmul.mubr.bf16.gmra.mxu0 %v841
        %v1054 = vpop.f32.mrf.mxu0
        %v1055 = vadd.f32 %v906, %v1054
        %v1056 = vpop.f32.mrf.mxu0
        %v1057 = vpop.f32.mrf.mxu0
        %v1058 = vadd.f32 %v906, %v1057
        %v1059 = vpop.f32.mrf.mxu0
        %1060 = vmatprep.mubr.bf16.mxu0 %v844
        %1061 = vmatmul.mubr.bf16.gmra.mxu0 %v843
        %v1062 = vpop.f32.mrf.mxu0
        %v1063 = vadd.f32 %v906, %v1062
        %v1064 = vpop.f32.mrf.mxu0
        %v1065 = vpop.f32.mrf.mxu0
        %v1066 = vadd.f32 %v906, %v1065
        %v1067 = vpop.f32.mrf.mxu0
        %1068 = vmatprep.mubr.bf16.mxu0 %v846
        %1069 = vmatmul.mubr.bf16.gmra.mxu0 %v845
        %v1070 = vpop.f32.mrf.mxu0
        %v1071 = vadd.f32 %v906, %v1070
        %v1072 = vpop.f32.mrf.mxu0
        %v1073 = vpop.f32.mrf.mxu0
        %v1074 = vadd.f32 %v906, %v1073
        %v1075 = vpop.f32.mrf.mxu0
        %1076 = vmatprep.mubr.bf16.mxu0 %v848
        %1077 = vmatmul.mubr.bf16.gmra.mxu0 %v847
        %v1078 = vpop.f32.mrf.mxu0
        %v1079 = vadd.f32 %v906, %v1078
        %v1080 = vpop.f32.mrf.mxu0
        %v1081 = vpop.f32.mrf.mxu0
        %v1082 = vadd.f32 %v906, %v1081
        %v1083 = vpop.f32.mrf.mxu0
        %1084 = vmatprep.mubr.bf16.mxu0 %v850
        %1085 = vmatmul.mubr.bf16.gmra.mxu0 %v849
        %v1086 = vpop.f32.mrf.mxu0
        %v1087 = vadd.f32 %v906, %v1086
        %v1088 = vpop.f32.mrf.mxu0
        %v1089 = vpop.f32.mrf.mxu0
        %v1090 = vadd.f32 %v906, %v1089
        %v1091 = vpop.f32.mrf.mxu0
        %1092 = vmatprep.mubr.bf16.mxu0 %v852
        %1093 = vmatmul.mubr.bf16.gmra.mxu0 %v851
        %v1094 = vpop.f32.mrf.mxu0
        %v1095 = vadd.f32 %v906, %v1094
        %v1096 = vpop.f32.mrf.mxu0
        %v1097 = vpop.f32.mrf.mxu0
        %v1098 = vadd.f32 %v906, %v1097
        %v1099 = vpop.f32.mrf.mxu0
        %1100 = vmatprep.mubr.bf16.mxu0 %v854
        %1101 = vmatmul.mubr.bf16.gmra.mxu0 %v853
        %v1102 = vpop.f32.mrf.mxu0
        %v1103 = vadd.f32 %v906, %v1102
        %v1104 = vpop.f32.mrf.mxu0
        %v1105 = vpop.f32.mrf.mxu0
        %v1106 = vadd.f32 %v906, %v1105
        %v1107 = vpop.f32.mrf.mxu0
        %1108 = vmatprep.mubr.bf16.mxu0 %v856
        %1109 = vmatmul.mubr.bf16.gmra.mxu0 %v855
        %v1110 = vpop.f32.mrf.mxu0
        %v1111 = vadd.f32 %v906, %v1110
        %v1112 = vpop.f32.mrf.mxu0
        %v1113 = vpop.f32.mrf.mxu0
        %v1114 = vadd.f32 %v906, %v1113
        %v1115 = vpop.f32.mrf.mxu0
        %1116 = vmatprep.mubr.bf16.mxu0 %v858
        %1117 = vmatmul.mubr.bf16.gmra.mxu0 %v857
        %v1118 = vpop.f32.mrf.mxu0
        %v1119 = vadd.f32 %v906, %v1118
        %v1120 = vpop.f32.mrf.mxu0
        %v1121 = vpop.f32.mrf.mxu0
        %v1122 = vadd.f32 %v906, %v1121
        %v1123 = vpop.f32.mrf.mxu0
        %1124 = vmatprep.mubr.bf16.mxu0 %v860
        %1125 = vmatmul.mubr.bf16.gmra.mxu0 %v859
        %v1126 = vpop.f32.mrf.mxu0
        %v1127 = vadd.f32 %v906, %v1126
        %v1128 = vpop.f32.mrf.mxu0
        %v1129 = vpop.f32.mrf.mxu0
        %v1130 = vadd.f32 %v906, %v1129
        %v1131 = vpop.f32.mrf.mxu0
        %1132 = vmatprep.mubr.bf16.mxu0 %v862
        %1133 = vmatmul.mubr.bf16.gmra.mxu0 %v861
        %v1134 = vpop.f32.mrf.mxu0
        %v1135 = vadd.f32 %v906, %v1134
        %v1136 = vpop.f32.mrf.mxu0
        %v1137 = vpop.f32.mrf.mxu0
        %v1138 = vadd.f32 %v906, %v1137
        %v1139 = vpop.f32.mrf.mxu0
        %1140 = vmatprep.mubr.bf16.mxu0 %v864
        %1141 = vmatmul.mubr.bf16.gmra.mxu0 %v863
        %v1142 = vpop.f32.mrf.mxu0
        %v1143 = vadd.f32 %v906, %v1142
        %v1144 = vpop.f32.mrf.mxu0
        %v1145 = vpop.f32.mrf.mxu0
        %v1146 = vadd.f32 %v906, %v1145
        %v1147 = vpop.f32.mrf.mxu0
        %1148 = vmatprep.mubr.bf16.mxu0 %v866
        %1149 = vmatmul.mubr.bf16.gmra.mxu0 %v865
        %v1150 = vpop.f32.mrf.mxu0
        %v1151 = vadd.f32 %v906, %v1150
        %v1152 = vpop.f32.mrf.mxu0
        %v1153 = vpop.f32.mrf.mxu0
        %v1154 = vadd.f32 %v906, %v1153
        %v1155 = vpop.f32.mrf.mxu0
        %1156 = vmatprep.mubr.bf16.mxu0 %v868
        %1157 = vmatmul.mubr.bf16.gmra.mxu0 %v867
        %v1158 = vpop.f32.mrf.mxu0
        %v1159 = vadd.f32 %v906, %v1158
        %v1160 = vpop.f32.mrf.mxu0
        %v1161 = vpop.f32.mrf.mxu0
        %v1162 = vadd.f32 %v906, %v1161
        %v1163 = vpop.f32.mrf.mxu0
        %1164 = vdwg.mxu0
        %v1165 = vmax.f32 %v1039, 0.0
        %v1166 = vmax.f32 %v1042, 0.0
        %v1167 = vmax.f32 %v1047, 0.0
        %v1168 = vmax.f32 %v1050, 0.0
        %v1169 = vmax.f32 %v1055, 0.0
        %v1170 = vmax.f32 %v1058, 0.0
        %v1171 = vmax.f32 %v1063, 0.0
        %v1172 = vmax.f32 %v1066, 0.0
        %v1173 = vmax.f32 %v1071, 0.0
        %v1174 = vmax.f32 %v1074, 0.0
        %v1175 = vmax.f32 %v1079, 0.0
        %v1176 = vmax.f32 %v1082, 0.0
        %v1177 = vmax.f32 %v1087, 0.0
        %v1178 = vmax.f32 %v1090, 0.0
        %v1179 = vmax.f32 %v1095, 0.0
        %v1180 = vmax.f32 %v1098, 0.0
        %v1181 = vmax.f32 %v1103, 0.0
        %v1182 = vmax.f32 %v1106, 0.0
        %v1183 = vmax.f32 %v1111, 0.0
        %v1184 = vmax.f32 %v1114, 0.0
        %v1185 = vmax.f32 %v1119, 0.0
        %v1186 = vmax.f32 %v1122, 0.0
        %v1187 = vmax.f32 %v1127, 0.0
        %v1188 = vmax.f32 %v1130, 0.0
        %v1189 = vmax.f32 %v1135, 0.0
        %v1190 = vmax.f32 %v1138, 0.0
        %v1191 = vmax.f32 %v1143, 0.0
        %v1192 = vmax.f32 %v1146, 0.0
        %v1193 = vmax.f32 %v1151, 0.0
        %v1194 = vmax.f32 %v1154, 0.0
        %v1195 = vmax.f32 %v1159, 0.0
        %v1196 = vmax.f32 %v1162, 0.0
        %v1197 = vpack.c.bf16 %v1166, %v1165
        %v1198 = vpack.c.bf16 %v1168, %v1167
        %v1199 = vpack.c.bf16 %v1170, %v1169
        %v1200 = vpack.c.bf16 %v1172, %v1171
        %v1201 = vpack.c.bf16 %v1174, %v1173
        %v1202 = vpack.c.bf16 %v1176, %v1175
        %v1203 = vpack.c.bf16 %v1178, %v1177
        %v1204 = vpack.c.bf16 %v1180, %v1179
        %v1205 = vpack.c.bf16 %v1182, %v1181
        %v1206 = vpack.c.bf16 %v1184, %v1183
        %v1207 = vpack.c.bf16 %v1186, %v1185
        %v1208 = vpack.c.bf16 %v1188, %v1187
        %v1209 = vpack.c.bf16 %v1190, %v1189
        %v1210 = vpack.c.bf16 %v1192, %v1191
        %v1211 = vpack.c.bf16 %v1194, %v1193
        %v1212 = vpack.c.bf16 %v1196, %v1195
        %v1213 = vld [vmem:[#allocation8] sm:$0xff]
        %v1214 = vld [vmem:[#allocation8 + $0x8] sm:$0xff]
        %v1215 = vld [vmem:[#allocation8 + $0x10] sm:$0xff]
        %v1216 = vld [vmem:[#allocation8 + $0x18] sm:$0xff]
        %v1217 = vld [vmem:[#allocation8 + $0x20] sm:$0xff]
        %v1218 = vld [vmem:[#allocation8 + $0x28] sm:$0xff]
        %v1219 = vld [vmem:[#allocation8 + $0x30] sm:$0xff]
        %v1220 = vld [vmem:[#allocation8 + $0x38] sm:$0xff]
        %v1221 = vld [vmem:[#allocation8 + $0x40] sm:$0xff]
        %v1222 = vld [vmem:[#allocation8 + $0x48] sm:$0xff]
        %v1223 = vld [vmem:[#allocation8 + $0x50] sm:$0xff]
        %v1224 = vld [vmem:[#allocation8 + $0x58] sm:$0xff]
        %v1225 = vld [vmem:[#allocation8 + $0x60] sm:$0xff]
        %v1226 = vld [vmem:[#allocation8 + $0x68] sm:$0xff]
        %v1227 = vld [vmem:[#allocation8 + $0x70] sm:$0xff]
        %v1228 = vld [vmem:[#allocation8 + $0x78] sm:$0xff]
        %v1229 = vld [vmem:[%s6] sm:$0x3]
        %v1231 = vlaneseq
        %v1232 = vshrl.u32 %v1231, 7
        %v1233 = vsub.s32 0, %v1232
        %v1234 = vrot.slane %v1229, %v1233
        %v1235 = vlaneseq
        %v1236 = vshrl.u32 %v1235, 7
        %v1237 = vsub.s32 1, %v1236
        %v1238 = vrot.slane %v1229, %v1237
        %v1257 = vunpack.c.l.b16 %v1213
        %v1258 = vunpack.c.h.b16 %v1213
        %v1259 = vunpack.c.l.b16 %v1214
        %v1260 = vunpack.c.h.b16 %v1214
        %v1261 = vunpack.c.l.b16 %v1215
        %v1262 = vunpack.c.h.b16 %v1215
        %v1263 = vunpack.c.l.b16 %v1216
        %v1264 = vunpack.c.h.b16 %v1216
        %v1265 = vunpack.c.l.b16 %v1217
        %v1266 = vunpack.c.h.b16 %v1217
        %v1267 = vunpack.c.l.b16 %v1218
        %v1268 = vunpack.c.h.b16 %v1218
        %v1269 = vunpack.c.l.b16 %v1219
        %v1270 = vunpack.c.h.b16 %v1219
        %v1271 = vunpack.c.l.b16 %v1220
        %v1272 = vunpack.c.h.b16 %v1220
        %v1273 = vunpack.c.l.b16 %v1221
        %v1274 = vunpack.c.h.b16 %v1221
        %v1275 = vunpack.c.l.b16 %v1222
        %v1276 = vunpack.c.h.b16 %v1222
        %v1277 = vunpack.c.l.b16 %v1223
        %v1278 = vunpack.c.h.b16 %v1223
        %v1279 = vunpack.c.l.b16 %v1224
        %v1280 = vunpack.c.h.b16 %v1224
        %v1281 = vunpack.c.l.b16 %v1225
        %v1282 = vunpack.c.h.b16 %v1225
        %v1283 = vunpack.c.l.b16 %v1226
        %v1284 = vunpack.c.h.b16 %v1226
        %v1285 = vunpack.c.l.b16 %v1227
        %v1286 = vunpack.c.h.b16 %v1227
        %v1287 = vunpack.c.l.b16 %v1228
        %v1288 = vunpack.c.h.b16 %v1228
        %v1289 = vpack.c.b16 %v1259, %v1257
        %v1290 = vpack.c.b16 %v1260, %v1258
        %v1291 = vpack.c.b16 %v1263, %v1261
        %v1292 = vpack.c.b16 %v1264, %v1262
        %v1293 = vpack.c.b16 %v1267, %v1265
        %v1294 = vpack.c.b16 %v1268, %v1266
        %v1295 = vpack.c.b16 %v1271, %v1269
        %v1296 = vpack.c.b16 %v1272, %v1270
        %v1297 = vpack.c.b16 %v1275, %v1273
        %v1298 = vpack.c.b16 %v1276, %v1274
        %v1299 = vpack.c.b16 %v1279, %v1277
        %v1300 = vpack.c.b16 %v1280, %v1278
        %v1301 = vpack.c.b16 %v1283, %v1281
        %v1302 = vpack.c.b16 %v1284, %v1282
        %v1303 = vpack.c.b16 %v1287, %v1285
        %v1304 = vpack.c.b16 %v1288, %v1286
        %1321 = vmatprep.subr.bf16.mxu0 %v1304
        %1322 = vmatpush1.bf16.msra.mxu0 %v1303
        %1323 = vmatprep.subr.bf16.mxu0 %v1302
        %1324 = vmatpush1.bf16.msra.mxu0 %v1301
        %1325 = vmatprep.subr.bf16.mxu0 %v1300
        %1326 = vmatpush1.bf16.msra.mxu0 %v1299
        %1327 = vmatprep.subr.bf16.mxu0 %v1298
        %1328 = vmatpush1.bf16.msra.mxu0 %v1297
        %1329 = vmatprep.subr.bf16.mxu0 %v1296
        %1330 = vmatpush1.bf16.msra.mxu0 %v1295
        %1331 = vmatprep.subr.bf16.mxu0 %v1294
        %1332 = vmatpush1.bf16.msra.mxu0 %v1293
        %1333 = vmatprep.subr.bf16.mxu0 %v1292
        %1334 = vmatpush1.bf16.msra.mxu0 %v1291
        %1335 = vmatprep.subr.bf16.mxu0 %v1290
        %1336 = vmatpush1.bf16.msra.mxu0 %v1289
        %1337 = vmatprep.subr.bf16.mxu0 0
        %1338 = vmatpush2.bf16.msra.mxu0 0
        %1339 = vmatprep.subr.bf16.mxu0 0
        %1340 = vmatpush2.bf16.msra.mxu0 0
        %1341 = vmatprep.subr.bf16.mxu0 0
        %1342 = vmatpush2.bf16.msra.mxu0 0
        %1343 = vmatprep.subr.bf16.mxu0 0
        %1344 = vmatpush2.bf16.msra.mxu0 0
        %1345 = vmatprep.subr.bf16.mxu0 0
        %1346 = vmatpush2.bf16.msra.mxu0 0
        %1347 = vmatprep.subr.bf16.mxu0 0
        %1348 = vmatpush2.bf16.msra.mxu0 0
        %1349 = vmatprep.subr.bf16.mxu0 0
        %1350 = vmatpush2.bf16.msra.mxu0 0
        %1351 = vmatprep.subr.bf16.mxu0 0
        %1352 = vmatpush2.bf16.msra.mxu0 0
        %1353 = vmatprep.mubr.bf16.mxu0 0
        %1354 = vmatmul.mubr.bf16.gmra.mxu0 %v1197
        %v1355 = vpop.f32.mrf.mxu0
        %v1356 = vadd.f32 %v1234, %v1355
        %v1357 = vpop.f32.mrf.mxu0
        %v1358 = vadd.f32 %v1238, %v1357
        %v1359 = vpop.f32.mrf.mxu0
        %v1360 = vadd.f32 %v1234, %v1359
        %v1361 = vpop.f32.mrf.mxu0
        %v1362 = vadd.f32 %v1238, %v1361
        %1363 = vmatprep.mubr.bf16.mxu0 0
        %1364 = vmatmul.mubr.bf16.gmra.mxu0 %v1198
        %v1365 = vpop.f32.mrf.mxu0
        %v1366 = vadd.f32 %v1234, %v1365
        %v1367 = vpop.f32.mrf.mxu0
        %v1368 = vadd.f32 %v1238, %v1367
        %v1369 = vpop.f32.mrf.mxu0
        %v1370 = vadd.f32 %v1234, %v1369
        %v1371 = vpop.f32.mrf.mxu0
        %v1372 = vadd.f32 %v1238, %v1371
        %1373 = vmatprep.mubr.bf16.mxu0 0
        %1374 = vmatmul.mubr.bf16.gmra.mxu0 %v1199
        %v1375 = vpop.f32.mrf.mxu0
        %v1376 = vadd.f32 %v1234, %v1375
        %v1377 = vpop.f32.mrf.mxu0
        %v1378 = vadd.f32 %v1238, %v1377
        %v1379 = vpop.f32.mrf.mxu0
        %v1380 = vadd.f32 %v1234, %v1379
        %v1381 = vpop.f32.mrf.mxu0
        %v1382 = vadd.f32 %v1238, %v1381
        %1383 = vmatprep.mubr.bf16.mxu0 0
        %1384 = vmatmul.mubr.bf16.gmra.mxu0 %v1200
        %v1385 = vpop.f32.mrf.mxu0
        %v1386 = vadd.f32 %v1234, %v1385
        %v1387 = vpop.f32.mrf.mxu0
        %v1388 = vadd.f32 %v1238, %v1387
        %v1389 = vpop.f32.mrf.mxu0
        %v1390 = vadd.f32 %v1234, %v1389
        %v1391 = vpop.f32.mrf.mxu0
        %v1392 = vadd.f32 %v1238, %v1391
        %1393 = vmatprep.mubr.bf16.mxu0 0
        %1394 = vmatmul.mubr.bf16.gmra.mxu0 %v1201
        %v1395 = vpop.f32.mrf.mxu0
        %v1396 = vadd.f32 %v1234, %v1395
        %v1397 = vpop.f32.mrf.mxu0
        %v1398 = vadd.f32 %v1238, %v1397
        %v1399 = vpop.f32.mrf.mxu0
        %v1400 = vadd.f32 %v1234, %v1399
        %v1401 = vpop.f32.mrf.mxu0
        %v1402 = vadd.f32 %v1238, %v1401
        %1403 = vmatprep.mubr.bf16.mxu0 0
        %1404 = vmatmul.mubr.bf16.gmra.mxu0 %v1202
        %v1405 = vpop.f32.mrf.mxu0
        %v1406 = vadd.f32 %v1234, %v1405
        %v1407 = vpop.f32.mrf.mxu0
        %v1408 = vadd.f32 %v1238, %v1407
        %v1409 = vpop.f32.mrf.mxu0
        %v1410 = vadd.f32 %v1234, %v1409
        %v1411 = vpop.f32.mrf.mxu0
        %v1412 = vadd.f32 %v1238, %v1411
        %1413 = vmatprep.mubr.bf16.mxu0 0
        %1414 = vmatmul.mubr.bf16.gmra.mxu0 %v1203
        %v1415 = vpop.f32.mrf.mxu0
        %v1416 = vadd.f32 %v1234, %v1415
        %v1417 = vpop.f32.mrf.mxu0
        %v1418 = vadd.f32 %v1238, %v1417
        %v1419 = vpop.f32.mrf.mxu0
        %v1420 = vadd.f32 %v1234, %v1419
        %v1421 = vpop.f32.mrf.mxu0
        %v1422 = vadd.f32 %v1238, %v1421
        %1423 = vmatprep.mubr.bf16.mxu0 0
        %1424 = vmatmul.mubr.bf16.gmra.mxu0 %v1204
        %v1425 = vpop.f32.mrf.mxu0
        %v1426 = vadd.f32 %v1234, %v1425
        %v1427 = vpop.f32.mrf.mxu0
        %v1428 = vadd.f32 %v1238, %v1427
        %v1429 = vpop.f32.mrf.mxu0
        %v1430 = vadd.f32 %v1234, %v1429
        %v1431 = vpop.f32.mrf.mxu0
        %v1432 = vadd.f32 %v1238, %v1431
        %1433 = vmatprep.mubr.bf16.mxu0 0
        %1434 = vmatmul.mubr.bf16.gmra.mxu0 %v1205
        %v1435 = vpop.f32.mrf.mxu0
        %v1436 = vadd.f32 %v1234, %v1435
        %v1437 = vpop.f32.mrf.mxu0
        %v1438 = vadd.f32 %v1238, %v1437
        %v1439 = vpop.f32.mrf.mxu0
        %v1440 = vadd.f32 %v1234, %v1439
        %v1441 = vpop.f32.mrf.mxu0
        %v1442 = vadd.f32 %v1238, %v1441
        %1443 = vmatprep.mubr.bf16.mxu0 0
        %1444 = vmatmul.mubr.bf16.gmra.mxu0 %v1206
        %v1445 = vpop.f32.mrf.mxu0
        %v1446 = vadd.f32 %v1234, %v1445
        %v1447 = vpop.f32.mrf.mxu0
        %v1448 = vadd.f32 %v1238, %v1447
        %v1449 = vpop.f32.mrf.mxu0
        %v1450 = vadd.f32 %v1234, %v1449
        %v1451 = vpop.f32.mrf.mxu0
        %v1452 = vadd.f32 %v1238, %v1451
        %1453 = vmatprep.mubr.bf16.mxu0 0
        %1454 = vmatmul.mubr.bf16.gmra.mxu0 %v1207
        %v1455 = vpop.f32.mrf.mxu0
        %v1456 = vadd.f32 %v1234, %v1455
        %v1457 = vpop.f32.mrf.mxu0
        %v1458 = vadd.f32 %v1238, %v1457
        %v1459 = vpop.f32.mrf.mxu0
        %v1460 = vadd.f32 %v1234, %v1459
        %v1461 = vpop.f32.mrf.mxu0
        %v1462 = vadd.f32 %v1238, %v1461
        %1463 = vmatprep.mubr.bf16.mxu0 0
        %1464 = vmatmul.mubr.bf16.gmra.mxu0 %v1208
        %v1465 = vpop.f32.mrf.mxu0
        %v1466 = vadd.f32 %v1234, %v1465
        %v1467 = vpop.f32.mrf.mxu0
        %v1468 = vadd.f32 %v1238, %v1467
        %v1469 = vpop.f32.mrf.mxu0
        %v1470 = vadd.f32 %v1234, %v1469
        %v1471 = vpop.f32.mrf.mxu0
        %v1472 = vadd.f32 %v1238, %v1471
        %1473 = vmatprep.mubr.bf16.mxu0 0
        %1474 = vmatmul.mubr.bf16.gmra.mxu0 %v1209
        %v1475 = vpop.f32.mrf.mxu0
        %v1476 = vadd.f32 %v1234, %v1475
        %v1477 = vpop.f32.mrf.mxu0
        %v1478 = vadd.f32 %v1238, %v1477
        %v1479 = vpop.f32.mrf.mxu0
        %v1480 = vadd.f32 %v1234, %v1479
        %v1481 = vpop.f32.mrf.mxu0
        %v1482 = vadd.f32 %v1238, %v1481
        %1483 = vmatprep.mubr.bf16.mxu0 0
        %1484 = vmatmul.mubr.bf16.gmra.mxu0 %v1210
        %v1485 = vpop.f32.mrf.mxu0
        %v1486 = vadd.f32 %v1234, %v1485
        %v1487 = vpop.f32.mrf.mxu0
        %v1488 = vadd.f32 %v1238, %v1487
        %v1489 = vpop.f32.mrf.mxu0
        %v1490 = vadd.f32 %v1234, %v1489
        %v1491 = vpop.f32.mrf.mxu0
        %v1492 = vadd.f32 %v1238, %v1491
        %1493 = vmatprep.mubr.bf16.mxu0 0
        %1494 = vmatmul.mubr.bf16.gmra.mxu0 %v1211
        %v1495 = vpop.f32.mrf.mxu0
        %v1496 = vadd.f32 %v1234, %v1495
        %v1497 = vpop.f32.mrf.mxu0
        %v1498 = vadd.f32 %v1238, %v1497
        %v1499 = vpop.f32.mrf.mxu0
        %v1500 = vadd.f32 %v1234, %v1499
        %v1501 = vpop.f32.mrf.mxu0
        %v1502 = vadd.f32 %v1238, %v1501
        %1503 = vmatprep.mubr.bf16.mxu0 0
        %1504 = vmatmul.mubr.bf16.gmra.mxu0 %v1212
        %v1505 = vpop.f32.mrf.mxu0
        %v1506 = vadd.f32 %v1234, %v1505
        %v1507 = vpop.f32.mrf.mxu0
        %v1508 = vadd.f32 %v1238, %v1507
        %v1509 = vpop.f32.mrf.mxu0
        %v1510 = vadd.f32 %v1234, %v1509
        %v1511 = vpop.f32.mrf.mxu0
        %v1512 = vadd.f32 %v1238, %v1511
        %1513 = vdwg.mxu0
        %1514 = vst [vmem:[%s340] sm:$0xff] %v1356
        %1515 = vst [vmem:[%s340 + $0x8] sm:$0xff] %v1358
        %1516 = vst [vmem:[%s340 + $0x10] sm:$0xff] %v1360
        %1517 = vst [vmem:[%s340 + $0x18] sm:$0xff] %v1362
        %1518 = vst [vmem:[%s340 + $0x20] sm:$0xff] %v1366
        %1519 = vst [vmem:[%s340 + $0x28] sm:$0xff] %v1368
        %1520 = vst [vmem:[%s340 + $0x30] sm:$0xff] %v1370
        %1521 = vst [vmem:[%s340 + $0x38] sm:$0xff] %v1372
        %1522 = vst [vmem:[%s340 + $0x40] sm:$0xff] %v1376
        %1523 = vst [vmem:[%s340 + $0x48] sm:$0xff] %v1378
        %1524 = vst [vmem:[%s340 + $0x50] sm:$0xff] %v1380
        %1525 = vst [vmem:[%s340 + $0x58] sm:$0xff] %v1382
        %1526 = vst [vmem:[%s340 + $0x60] sm:$0xff] %v1386
        %1527 = vst [vmem:[%s340 + $0x68] sm:$0xff] %v1388
        %1528 = vst [vmem:[%s340 + $0x70] sm:$0xff] %v1390
        %1529 = vst [vmem:[%s340 + $0x78] sm:$0xff] %v1392
        %1530 = vst [vmem:[%s340 + $0x80] sm:$0xff] %v1396
        %1531 = vst [vmem:[%s340 + $0x88] sm:$0xff] %v1398
        %1532 = vst [vmem:[%s340 + $0x90] sm:$0xff] %v1400
        %1533 = vst [vmem:[%s340 + $0x98] sm:$0xff] %v1402
        %1534 = vst [vmem:[%s340 + $0xa0] sm:$0xff] %v1406
        %1535 = vst [vmem:[%s340 + $0xa8] sm:$0xff] %v1408
        %1536 = vst [vmem:[%s340 + $0xb0] sm:$0xff] %v1410
        %1537 = vst [vmem:[%s340 + $0xb8] sm:$0xff] %v1412
        %1538 = vst [vmem:[%s340 + $0xc0] sm:$0xff] %v1416
        %1539 = vst [vmem:[%s340 + $0xc8] sm:$0xff] %v1418
        %1540 = vst [vmem:[%s340 + $0xd0] sm:$0xff] %v1420
        %1541 = vst [vmem:[%s340 + $0xd8] sm:$0xff] %v1422
        %1542 = vst [vmem:[%s340 + $0xe0] sm:$0xff] %v1426
        %1543 = vst [vmem:[%s340 + $0xe8] sm:$0xff] %v1428
        %1544 = vst [vmem:[%s340 + $0xf0] sm:$0xff] %v1430
        %1545 = vst [vmem:[%s340 + $0xf8] sm:$0xff] %v1432
        %1546 = vst [vmem:[%s340 + $0x100] sm:$0xff] %v1436
        %1547 = vst [vmem:[%s340 + $0x108] sm:$0xff] %v1438
        %1548 = vst [vmem:[%s340 + $0x110] sm:$0xff] %v1440
        %1549 = vst [vmem:[%s340 + $0x118] sm:$0xff] %v1442
        %1550 = vst [vmem:[%s340 + $0x120] sm:$0xff] %v1446
        %1551 = vst [vmem:[%s340 + $0x128] sm:$0xff] %v1448
        %1552 = vst [vmem:[%s340 + $0x130] sm:$0xff] %v1450
        %1553 = vst [vmem:[%s340 + $0x138] sm:$0xff] %v1452
        %1554 = vst [vmem:[%s340 + $0x140] sm:$0xff] %v1456
        %1555 = vst [vmem:[%s340 + $0x148] sm:$0xff] %v1458
        %1556 = vst [vmem:[%s340 + $0x150] sm:$0xff] %v1460
        %1557 = vst [vmem:[%s340 + $0x158] sm:$0xff] %v1462
        %1558 = vst [vmem:[%s340 + $0x160] sm:$0xff] %v1466
        %1559 = vst [vmem:[%s340 + $0x168] sm:$0xff] %v1468
        %1560 = vst [vmem:[%s340 + $0x170] sm:$0xff] %v1470
        %1561 = vst [vmem:[%s340 + $0x178] sm:$0xff] %v1472
        %1562 = vst [vmem:[%s340 + $0x180] sm:$0xff] %v1476
        %1563 = vst [vmem:[%s340 + $0x188] sm:$0xff] %v1478
        %1564 = vst [vmem:[%s340 + $0x190] sm:$0xff] %v1480
        %1565 = vst [vmem:[%s340 + $0x198] sm:$0xff] %v1482
        %1566 = vst [vmem:[%s340 + $0x1a0] sm:$0xff] %v1486
        %1567 = vst [vmem:[%s340 + $0x1a8] sm:$0xff] %v1488
        %1568 = vst [vmem:[%s340 + $0x1b0] sm:$0xff] %v1490
        %1569 = vst [vmem:[%s340 + $0x1b8] sm:$0xff] %v1492
        %1570 = vst [vmem:[%s340 + $0x1c0] sm:$0xff] %v1496
        %1571 = vst [vmem:[%s340 + $0x1c8] sm:$0xff] %v1498
        %1572 = vst [vmem:[%s340 + $0x1d0] sm:$0xff] %v1500
        %1573 = vst [vmem:[%s340 + $0x1d8] sm:$0xff] %v1502
        %1574 = vst [vmem:[%s340 + $0x1e0] sm:$0xff] %v1506
        %1575 = vst [vmem:[%s340 + $0x1e8] sm:$0xff] %v1508
        %1576 = vst [vmem:[%s340 + $0x1f0] sm:$0xff] %v1510
        %1577 = vst [vmem:[%s340 + $0x1f8] sm:$0xff] %v1512
        %s1578 = sand.u32 %s186, 1
        %s1579 = scalar_lea.sflag [#allocation4], %s1578
        %s1580 = sand.u32 %s186, 1
        %s1581 = smul.addr %s1580, 512
        %s1582 = scalar_lea.vmem [#allocation10], %s1581
        // Predicated region
        $region65: #{tpu_custom_call.1} parent=47 // pred_check
          %p1583 = pneg %p196
        $region66: #{tpu_custom_call.1} parent=47 // pred_check_branch
          %1585 = sbr.rel (%p1583) target = $region68
        $region67: #{tpu_custom_call.1} parent=47 // pred_region
          %s1586 = smul.u32 32, %s26
          %s1588 = ssub.s32 8192, 8192
          %1589 = vsyncadd %s1579, %s1588
          %s1590 = smul.addr %s1586, 2
          %s1591 = smul.addr %s1590, 128
          %s1592 = scalar_lea.hbm %s7, %s1591
          %s1593 = sshll.u32 %s1582, 4
          %s1594 = int_to_ptr.vmem [resolvable:$true] %s1593
          %1599 = dma.vmem_to_hbm [thread:$0]  %s1594, 8192, %s1592, %s1579, 256, 256, 16
        $region68: #{tpu_custom_call.1} parent=47 // pred_fallthru
          _
      $region48: #{tpu_custom_call.1} parent=5 // pred_fallthru
        _
      %p1600 = scmp.le.s32.totalorder 2, %s21
      // Predicated region
      $region69: #{tpu_custom_call.1} parent=5 // pred_check
        %p1601 = pneg %p1600
      $region70: #{tpu_custom_call.1} parent=5 // pred_check_branch
        %1603 = sbr.rel (%p1601) target = $region72
      $region71: #{tpu_custom_call.1} parent=5 // pred_region
        %s1604 = ssub.s32 %s21, 2
        // Predicated region
        $region73: #{tpu_custom_call.1} parent=71 // pred_check
          %p1605 = pneg %p202
        $region74: #{tpu_custom_call.1} parent=71 // pred_check_branch
          %1607 = sbr.rel (%p1605) target = $region76
        $region75: #{tpu_custom_call.1} parent=71 // pred_region
          %s1608 = sand.u32 %s187, 1
          %s1609 = scalar_lea.sflag [#allocation4], %s1608
          %s1610 = sand.u32 %s187, 1
          %s1611 = smul.addr %s1610, 512
          %s1612 = scalar_lea.vmem [#allocation10], %s1611
          %1613 = dma.done %s1609, 8192
        $region76: #{tpu_custom_call.1} parent=71 // pred_fallthru
          _
      $region72: #{tpu_custom_call.1} parent=5 // pred_fallthru
        _
    $region6: #{tpu_custom_call.1} parent=1 // loop_footer
      %s25 = sadd.s32 1, %s21
    $region7: #{tpu_custom_call.1} parent=1 // loop_footer_branch
      %20 = sbr.rel target = $region3
    $region8: #{tpu_custom_call.1} parent=1 // loop_exit
      _
    %1614 = vsyncpa [#allocation3], 1
    %s1615 = scalar_lea.sflag [#allocation3], 1
    %1616 = vsyncpa %s1615, 1
    %1617 = vsyncpa [#allocation6], 1
    %1618 = vsyncpa [#allocation9], 1
    %1619 = vsyncpa [#allocation4], 1
    %s1620 = scalar_lea.sflag [#allocation4], 1
    %1621 = vsyncpa %s1620, 1

</llo_original>
